<compile_context>
chip_gen: v6e
topology: v6e:2x2x1
jax: 0.10.0
libtpu: 0.0.40
codegen_flags: <defaults>
</compile_context>

<pallas_src>
import jax
import jax.numpy as jnp
from jax.experimental import pallas as pl
from jax.experimental.pallas import tpu as pltpu


# ----------------------------------------------------------------------------
# Pallas kernel: one (batch, HW-tile) per grid step.  Per-pixel work only:
# conv_in, conv_cat (with conv_in folded in), local_att, sigmoid gate, blend.
# ----------------------------------------------------------------------------
def _avff_kernel(
    x_ref,       # (1, T, 2C) input dtype : conv_in input tile
    t_ref,       # (1, T,  C) input dtype
    g2_ref,      # (1, 1,  C) f32 : precomputed global_att(mean(conv_in(x)+t))
    w_in_ref,    # (2C, C) bf16 : conv_in
    b_in_ref,    # (1,  C) f32
    w_comb_ref,  # (2C, C) bf16 : W_in @ W_cat[:C]  (conv_in folded into conv_cat)
    w_ct_ref,    # (C,  C) bf16 : conv_cat half acting on t
    b_comb_ref,  # (1,  C) f32  : b_in @ W_cat[:C] + b_cat
    w_l1_ref,    # (C,  I) bf16 : local_att conv1 (+BN folded), I padded to 128
    b_l1_ref,    # (1,  I) f32
    w_l2_ref,    # (I,  C) bf16 : local_att conv2 (+BN folded)
    b_l2_ref,    # (1,  C) f32
    out_ref,     # (1, T,  C)
):
    f32, bf16 = jnp.float32, jnp.bfloat16

    # Cast to bf16 in-kernel: inputs arrive in their original dtype straight
    # from HBM (no wrapper-side cast/pad copies).
    x_in = x_ref[0].astype(bf16)        # (T, 2C)
    t_f32 = t_ref[0].astype(f32)        # (T,  C)
    t_bf = t_ref[0].astype(bf16)

    # x = conv_in(x): needed for the final blend.  bf16 MXU, f32 accumulation.
    x = jnp.dot(x_in, w_in_ref[...], preferred_element_type=f32) + b_in_ref[...]

    # xl = conv_cat(cat([conv_in(x), t])) with conv_in pre-folded into W_comb:
    # independent of `x` (no back-to-back MXU dependency) and K = 2C = 128.
    xl = (jnp.dot(x_in, w_comb_ref[...], preferred_element_type=f32)
          + jnp.dot(t_bf, w_ct_ref[...], preferred_element_type=f32)
          + b_comb_ref[...])

    # local_att: conv -> BN -> ReLU -> conv -> BN (BN folded into the convs;
    # hidden width zero-padded to 128 lanes in the wrapper).
    h = jnp.maximum(
        jnp.dot(xl.astype(bf16), w_l1_ref[...], preferred_element_type=f32)
        + b_l1_ref[...], 0.0)
    xl = (jnp.dot(h.astype(bf16), w_l2_ref[...], preferred_element_type=f32)
          + b_l2_ref[...])

    # wei = sigmoid(xl + global_branch); the global term is the per-batch
    # whole-image (1, C) result computed outside and broadcast over the tile.
    x3 = xl + g2_ref[0]
    wei = pl.reciprocal(1.0 + jnp.exp(-x3), approx=True)   # exp + rcp on EUP

    # out = 2*x*wei + 2*t*(1-wei)  ==  2*(t + wei*(x - t))   (fewer VPU ops).
    out_ref[0] = (2.0 * (t_f32 + wei * (x - t_f32))).astype(out_ref.dtype)


# ----------------------------------------------------------------------------
# Helpers: BN folding, rounding, and HW tiling choice.
# ----------------------------------------------------------------------------
def _fold_bn(w, b, gamma, beta, mean, var, eps=1e-5):
    """Fold inference-mode BatchNorm into a preceding 1x1 conv.

    w: (Cin, Cout) channels-last matmul weight, b: (Cout,).
    """
    scale = gamma / jnp.sqrt(var + eps)          # (Cout,)
    return w * scale[None, :], (b - mean) * scale + beta


def _round_up(v, m):
    return ((v + m - 1) // m) * m


_ACT_VMEM_BUDGET = 20 << 20   # activation bytes per grid step (safe v5e..v7x)


def _choose_tiling(hw, batch, bytes_per_row):
    """Pick an HW tile size and grid extent along the spatial axis.

    `bytes_per_row` counts the double-buffered in/out slabs plus the f32
    intermediates of one pixel row, so `tile * bytes_per_row` tracks actual
    VMEM use.  Small images run as a single full-extent block (always a legal
    BlockSpec); otherwise tiles are 16-aligned (bf16 sublane packing) chunks
    that fit the budget, and on multi-TC parts (v7x) we try to keep
    batch * n_tiles >= 4 so both TensorCores get work.
    """
    target = max(512, min(8192, (_ACT_VMEM_BUDGET // bytes_per_row) // 16 * 16))
    if hw * bytes_per_row <= _ACT_VMEM_BUDGET and (batch >= 4 or hw <= 4096):
        return hw, 1
    n_tiles = max(pl.cdiv(hw, target),                           # VMEM budget
                  min(pl.cdiv(4, batch), max(hw // 2048, 1)))    # TC occupancy
    tile = _round_up(pl.cdiv(hw, n_tiles), 16)
    n_tiles = pl.cdiv(hw, tile)       # last tile may be partial (masked)
    return tile, n_tiles


# ----------------------------------------------------------------------------
# Channels-last entry point (preferred: no layout transposes).
# x_cl: (B, HW, 2C), t_cl: (B, HW, C) -> (B, HW, C)
# ----------------------------------------------------------------------------
@jax.jit
def avff_attention_nlc(x_cl, t_cl, params):
    B, HW, C2 = x_cl.shape
    C = t_cl.shape[-1]
    assert C2 == 2 * C
    p = params
    f32, bf16 = jnp.float32, jnp.bfloat16
    out_dtype = x_cl.dtype

    # ---- Fold inference-mode BN into the local / global 1x1 convs. ----
    # TODO(synk): training-mode BatchNorm (batch statistics) is not reproduced.
    w_l1, b_l1 = _fold_bn(p["w_l1"], p["b_l1"], p["bn_l1_g"], p["bn_l1_b"],
                          p["bn_l1_m"], p["bn_l1_v"])
    w_l2, b_l2 = _fold_bn(p["w_l2"], p["b_l2"], p["bn_l2_g"], p["bn_l2_b"],
                          p["bn_l2_m"], p["bn_l2_v"])
    w_g1, b_g1 = _fold_bn(p["w_g1"], p["b_g1"], p["bn_g1_g"], p["bn_g1_b"],
                          p["bn_g1_m"], p["bn_g1_v"])
    w_g2, b_g2 = _fold_bn(p["w_g2"], p["b_g2"], p["bn_g2_g"], p["bn_g2_b"],
                          p["bn_g2_m"], p["bn_g2_v"])

    # conv_cat split into halves acting on conv_in(x) and on t; pre-fold the
    # (linear) conv_in into the x-half so the in-kernel matmuls are independent:
    #   conv_cat(cat([conv_in(x), t])) = x @ (W_in @ W_cx) + t @ W_ct
    #                                    + (b_in @ W_cx + b_cat)
    w_cx = p["w_cat"][:C, :]
    w_ct = p["w_cat"][C:, :]
    w_comb = p["w_in"] @ w_cx
    b_comb = p["b_in"] @ w_cx + p["b_cat"]

    # Zero-pad local_att's hidden width to a lane-dense multiple of 128.
    inter = w_l1.shape[1]
    inter_pad = max(128, _round_up(inter, 128))
    w_l1 = jnp.pad(w_l1, ((0, 0), (0, inter_pad - inter)))
    b_l1 = jnp.pad(b_l1, (0, inter_pad - inter))
    w_l2 = jnp.pad(w_l2, ((0, inter_pad - inter), (0, 0)))

    # ---- Global-attention branch, hoisted out of the hot kernel (O(B*C)). ----
    # mean_HW(conv_in(x) + t) == mean_HW(x) @ W_in + b_in + mean_HW(t).
    # These two means are the only extra reads of x/t and fuse to one pass each.
    g = (jnp.mean(x_cl, axis=1, dtype=f32) @ p["w_in"] + p["b_in"]
         + jnp.mean(t_cl, axis=1, dtype=f32))
    gh = jax.nn.relu(g @ w_g1 + b_g1)
    g2 = (gh @ w_g2 + b_g2)[:, None, :].astype(f32)          # (B, 1, C)

    # ---- HW tiling: x/t stream straight from HBM (no cast/pad copies). ----
    bytes_per_row = (2 * (C2 * x_cl.dtype.itemsize              # 2x-buffered x
                          + C * t_cl.dtype.itemsize             # 2x-buffered t
                          + C * jnp.dtype(out_dtype).itemsize)  # 2x-buffered out
                     + 4 * (3 * C + inter_pad + C2))            # f32 temps
    tile, n_tiles = _choose_tiling(HW, B, bytes_per_row)
    # Sized from the actual buffers; capped below v7x's 64 MiB physical VMEM.
    vmem_limit = int(min(max(tile * bytes_per_row + (6 << 20), 32 << 20),
                         56 << 20))

    as_row = lambda v: v.reshape(1, -1).astype(f32)
    weight_args = (
        p["w_in"].astype(bf16), as_row(p["b_in"]),
        w_comb.astype(bf16), w_ct.astype(bf16), as_row(b_comb),
        w_l1.astype(bf16), as_row(b_l1),
        w_l2.astype(bf16), as_row(b_l2),
    )

    # Constant-index weight blocks are DMA'd once and reused every grid step.
    # (pipeline_mode=pl.Buffered(1) would also drop their second buffer; the
    #  ~40 KB saving is not worth the extra lowering surface here.)
    def full(shape):
        return pl.BlockSpec(shape, lambda b, s: (0, 0))

    in_specs = [
        pl.BlockSpec((1, tile, C2), lambda b, s: (b, s, 0)),   # x
        pl.BlockSpec((1, tile, C), lambda b, s: (b, s, 0)),    # t
        pl.BlockSpec((1, 1, C), lambda b, s: (b, 0, 0)),       # g2 (per batch)
        full((C2, C)), full((1, C)),                           # conv_in
        full((C2, C)), full((C, C)), full((1, C)),             # conv_cat (folded)
        full((C, inter_pad)), full((1, inter_pad)),            # local conv1
        full((inter_pad, C)), full((1, C)),                    # local conv2
    ]

    return pl.pallas_call(
        _avff_kernel,
        out_shape=jax.ShapeDtypeStruct((B, HW, C), out_dtype),
        grid_spec=pltpu.PrefetchScalarGridSpec(
            num_scalar_prefetch=0,
            grid=(B, n_tiles),
            in_specs=in_specs,
            out_specs=pl.BlockSpec((1, tile, C), lambda b, s: (b, s, 0)),
        ),
        compiler_params=pltpu.CompilerParams(
            # Both axes independent -> shard across TensorCores on megacore parts.
            dimension_semantics=("parallel", "parallel"),
            vmem_limit_bytes=vmem_limit,
        ),
    )(x_cl, t_cl, g2, *weight_args)


# ----------------------------------------------------------------------------
# NCHW wrapper matching the PyTorch module signature.  Prefer
# avff_attention_nlc for channels-last pipelines (skips both transposes).
# ----------------------------------------------------------------------------
@jax.jit
def avff_attention(x_nchw, t_nchw, params):
    B, C2, H, W = x_nchw.shape
    C = t_nchw.shape[1]
    x_cl = jnp.transpose(x_nchw, (0, 2, 3, 1)).reshape(B, H * W, C2)
    t_cl = jnp.transpose(t_nchw, (0, 2, 3, 1)).reshape(B, H * W, C)
    out_cl = avff_attention_nlc(x_cl, t_cl, params)
    return out_cl.reshape(B, H, W, C).transpose(0, 3, 1, 2)


# ----------------------------------------------------------------------------
# Pure-JAX f32 reference (channels-last math), for a correctness check.
# ----------------------------------------------------------------------------
def avff_attention_ref(x_nchw, t_nchw, params):
    B, C2, H, W = x_nchw.shape
    C = t_nchw.shape[1]
    x_cl = jnp.transpose(x_nchw, (0, 2, 3, 1)).reshape(B, H * W, C2)
    t_cl = jnp.transpose(t_nchw, (0, 2, 3, 1)).reshape(B, H * W, C)
    p = params

    def bn(y, g, b, m, v, eps=1e-5):
        return (y - m) / jnp.sqrt(v + eps) * g + b

    x = x_cl @ p["w_in"] + p["b_in"]
    xl = jnp.concatenate([x, t_cl], axis=-1) @ p["w_cat"] + p["b_cat"]
    h = jax.nn.relu(bn(xl @ p["w_l1"] + p["b_l1"], p["bn_l1_g"], p["bn_l1_b"],
                       p["bn_l1_m"], p["bn_l1_v"]))
    xl = bn(h @ p["w_l2"] + p["b_l2"], p["bn_l2_g"], p["bn_l2_b"],
            p["bn_l2_m"], p["bn_l2_v"])
    x2 = x + t_cl
    g = jnp.mean(x2, axis=1, keepdims=True)
    gh = jax.nn.relu(bn(g @ p["w_g1"] + p["b_g1"], p["bn_g1_g"], p["bn_g1_b"],
                        p["bn_g1_m"], p["bn_g1_v"]))
    g2 = bn(gh @ p["w_g2"] + p["b_g2"], p["bn_g2_g"], p["bn_g2_b"],
            p["bn_g2_m"], p["bn_g2_v"])
    wei = jax.nn.sigmoid(xl + g2)
    out = 2.0 * x * wei + 2.0 * t_cl * (1.0 - wei)
    return out.reshape(B, H, W, C).transpose(0, 3, 1, 2)


# ----------------------------------------------------------------------------
# Deterministic parameter init (synthetic; matches nn.Module shapes, with
# Conv2d weights stored transposed as (Cin, Cout) for channels-last matmul).
# ----------------------------------------------------------------------------
def init_params(key, channels=64, r=4):
    inter = channels // r
    keys = jax.random.split(key, 16)

    def w(k, shape, scale=0.05):
        return scale * jax.random.normal(k, shape, dtype=jnp.float32)

    def bn_stats(k, c):
        kg, kb, km, kv = jax.random.split(k, 4)
        return dict(
            g=1.0 + 0.1 * jax.random.normal(kg, (c,), jnp.float32),
            b=0.1 * jax.random.normal(kb, (c,), jnp.float32),
            m=0.1 * jax.random.normal(km, (c,), jnp.float32),
            v=1.0 + 0.1 * jax.random.uniform(kv, (c,), jnp.float32),
        )

    bn_l1 = bn_stats(keys[8], inter)
    bn_l2 = bn_stats(keys[9], channels)
    bn_g1 = bn_stats(keys[10], inter)
    bn_g2 = bn_stats(keys[11], channels)

    return dict(
        w_in=w(keys[0], (2 * channels, channels)), b_in=w(keys[1], (channels,)),
        w_cat=w(keys[2], (2 * channels, channels)), b_cat=w(keys[3], (channels,)),
        w_l1=w(keys[4], (channels, inter)), b_l1=w(keys[5], (inter,)),
        w_l2=w(keys[6], (inter, channels)), b_l2=w(keys[7], (channels,)),
        bn_l1_g=bn_l1["g"], bn_l1_b=bn_l1["b"], bn_l1_m=bn_l1["m"], bn_l1_v=bn_l1["v"],
        bn_l2_g=bn_l2["g"], bn_l2_b=bn_l2["b"], bn_l2_m=bn_l2["m"], bn_l2_v=bn_l2["v"],
        w_g1=w(keys[12], (channels, inter)), b_g1=w(keys[13], (inter,)),
        w_g2=w(keys[14], (inter, channels)), b_g2=w(keys[15], (channels,)),
        bn_g1_g=bn_g1["g"], bn_g1_b=bn_g1["b"], bn_g1_m=bn_g1["m"], bn_g1_v=bn_g1["v"],
        bn_g2_g=bn_g2["g"], bn_g2_b=bn_g2["b"], bn_g2_m=bn_g2["m"], bn_g2_v=bn_g2["v"],
    )


if __name__ == "__main__":
    channels, r = 64, 4
    B, H, W = 2, 8, 8

    key = jax.random.PRNGKey(0)
    kx, kt, kp = jax.random.split(key, 3)
    x = jax.random.normal(kx, (B, 2 * channels, H, W), dtype=jnp.float32)  # NCHW
    t = jax.random.normal(kt, (B, channels, H, W), dtype=jnp.float32)      # NCHW
    params = init_params(kp, channels=channels, r=r)

    out = avff_attention(x, t, params)
    out = jax.block_until_ready(out)

    ref = avff_attention_ref(x, t, params)
    assert out.shape == (B, channels, H, W)
    # bf16 activations/weights + approx reciprocal inside the kernel
    # -> loosened tolerance vs f32 reference.
    assert jnp.allclose(out, ref, atol=5e-2, rtol=5e-2), "mismatch vs reference"

    print("KERNEL_OK")
</pallas_src>

<mosaic_0001>
module attributes {stable_mosaic.version = 11 : i64} {
  func.func @_avff_kernel(%arg0: i32, %arg1: i32, %arg2: memref<1x64x128xf32, #tpu.memory_space<vmem>>, %arg3: memref<1x64x64xf32, #tpu.memory_space<vmem>>, %arg4: memref<1x1x64xf32, #tpu.memory_space<vmem>>, %arg5: memref<128x64xbf16, #tpu.memory_space<vmem>>, %arg6: memref<1x64xf32, #tpu.memory_space<vmem>>, %arg7: memref<128x64xbf16, #tpu.memory_space<vmem>>, %arg8: memref<64x64xbf16, #tpu.memory_space<vmem>>, %arg9: memref<1x64xf32, #tpu.memory_space<vmem>>, %arg10: memref<64x128xbf16, #tpu.memory_space<vmem>>, %arg11: memref<1x128xf32, #tpu.memory_space<vmem>>, %arg12: memref<128x64xbf16, #tpu.memory_space<vmem>>, %arg13: memref<1x64xf32, #tpu.memory_space<vmem>>, %arg14: memref<1x64x64xf32, #tpu.memory_space<vmem>>) attributes {dimension_semantics = [#tpu.dimension_semantics<parallel>, #tpu.dimension_semantics<parallel>], iteration_bounds = array<i64: 2, 1>, scalar_prefetch = 0 : i64, scratch_operands = 0 : i64, tpu.core_type = #tpu.core_type<tc>, window_params = [{transform_indices = @transform_0, window_bounds = array<i64: 1, 64, 128>}, {transform_indices = @transform_1, window_bounds = array<i64: 1, 64, 64>}, {transform_indices = @transform_2, window_bounds = array<i64: 1, 1, 64>}, {pipeline_mode = #tpu.pipeline_mode<synchronous>, transform_indices = @transform_3, window_bounds = array<i64: 128, 64>}, {pipeline_mode = #tpu.pipeline_mode<synchronous>, transform_indices = @transform_4, window_bounds = array<i64: 1, 64>}, {pipeline_mode = #tpu.pipeline_mode<synchronous>, transform_indices = @transform_5, window_bounds = array<i64: 128, 64>}, {pipeline_mode = #tpu.pipeline_mode<synchronous>, transform_indices = @transform_6, window_bounds = array<i64: 64, 64>}, {pipeline_mode = #tpu.pipeline_mode<synchronous>, transform_indices = @transform_7, window_bounds = array<i64: 1, 64>}, {pipeline_mode = #tpu.pipeline_mode<synchronous>, transform_indices = @transform_8, window_bounds = array<i64: 64, 128>}, {pipeline_mode = #tpu.pipeline_mode<synchronous>, transform_indices = @transform_9, window_bounds = array<i64: 1, 128>}, {pipeline_mode = #tpu.pipeline_mode<synchronous>, transform_indices = @transform_10, window_bounds = array<i64: 128, 64>}, {pipeline_mode = #tpu.pipeline_mode<synchronous>, transform_indices = @transform_11, window_bounds = array<i64: 1, 64>}, {transform_indices = @transform_12, window_bounds = array<i64: 1, 64, 64>}]} {
    %c0 = arith.constant 0 : index
    %c0_0 = arith.constant 0 : index
    %c0_1 = arith.constant 0 : index
    %0 = vector.load %arg2[%c0, %c0_0, %c0_1] : memref<1x64x128xf32, #tpu.memory_space<vmem>>, vector<1x64x128xf32>
    %1 = vector.shape_cast %0 : vector<1x64x128xf32> to vector<64x128xf32>
    %2 = arith.truncf %1 : vector<64x128xf32> to vector<64x128xbf16>
    %c0_2 = arith.constant 0 : index
    %c0_3 = arith.constant 0 : index
    %c0_4 = arith.constant 0 : index
    %3 = vector.load %arg3[%c0_2, %c0_3, %c0_4] : memref<1x64x64xf32, #tpu.memory_space<vmem>>, vector<1x64x64xf32>
    %4 = vector.shape_cast %3 : vector<1x64x64xf32> to vector<64x64xf32>
    %c0_5 = arith.constant 0 : index
    %c0_6 = arith.constant 0 : index
    %c0_7 = arith.constant 0 : index
    %5 = vector.load %arg3[%c0_5, %c0_6, %c0_7] : memref<1x64x64xf32, #tpu.memory_space<vmem>>, vector<1x64x64xf32>
    %6 = vector.shape_cast %5 : vector<1x64x64xf32> to vector<64x64xf32>
    %7 = arith.truncf %6 : vector<64x64xf32> to vector<64x64xbf16>
    %c0_8 = arith.constant 0 : index
    %c0_9 = arith.constant 0 : index
    %8 = vector.load %arg5[%c0_8, %c0_9] : memref<128x64xbf16, #tpu.memory_space<vmem>>, vector<128x64xbf16>
    %cst = arith.constant dense<0.000000e+00> : vector<64x64xf32>
    %9 = tpu.matmul %2, %8, %cst {dimension_numbers = #tpu.dot_dimension_numbers<[1], [0], [0], [1], [0, 0, 1, 1], [], []>} : vector<64x128xbf16>, vector<128x64xbf16>, vector<64x64xf32> -> vector<64x64xf32>
    %c0_10 = arith.constant 0 : index
    %c0_11 = arith.constant 0 : index
    %10 = vector.load %arg6[%c0_10, %c0_11] : memref<1x64xf32, #tpu.memory_space<vmem>>, vector<1x64xf32>
    %11 = vector.broadcast %10 : vector<1x64xf32> to vector<64x64xf32>
    %12 = arith.addf %9, %11 : vector<64x64xf32>
    %c0_12 = arith.constant 0 : index
    %c0_13 = arith.constant 0 : index
    %13 = vector.load %arg7[%c0_12, %c0_13] : memref<128x64xbf16, #tpu.memory_space<vmem>>, vector<128x64xbf16>
    %cst_14 = arith.constant dense<0.000000e+00> : vector<64x64xf32>
    %14 = tpu.matmul %2, %13, %cst_14 {dimension_numbers = #tpu.dot_dimension_numbers<[1], [0], [0], [1], [0, 0, 1, 1], [], []>} : vector<64x128xbf16>, vector<128x64xbf16>, vector<64x64xf32> -> vector<64x64xf32>
    %c0_15 = arith.constant 0 : index
    %c0_16 = arith.constant 0 : index
    %15 = vector.load %arg8[%c0_15, %c0_16] : memref<64x64xbf16, #tpu.memory_space<vmem>>, vector<64x64xbf16>
    %cst_17 = arith.constant dense<0.000000e+00> : vector<64x64xf32>
    %16 = tpu.matmul %7, %15, %cst_17 {dimension_numbers = #tpu.dot_dimension_numbers<[1], [0], [0], [1], [0, 0, 1, 1], [], []>} : vector<64x64xbf16>, vector<64x64xbf16>, vector<64x64xf32> -> vector<64x64xf32>
    %17 = arith.addf %14, %16 : vector<64x64xf32>
    %c0_18 = arith.constant 0 : index
    %c0_19 = arith.constant 0 : index
    %18 = vector.load %arg9[%c0_18, %c0_19] : memref<1x64xf32, #tpu.memory_space<vmem>>, vector<1x64xf32>
    %19 = vector.broadcast %18 : vector<1x64xf32> to vector<64x64xf32>
    %20 = arith.addf %17, %19 : vector<64x64xf32>
    %21 = arith.truncf %20 : vector<64x64xf32> to vector<64x64xbf16>
    %c0_20 = arith.constant 0 : index
    %c0_21 = arith.constant 0 : index
    %22 = vector.load %arg10[%c0_20, %c0_21] : memref<64x128xbf16, #tpu.memory_space<vmem>>, vector<64x128xbf16>
    %cst_22 = arith.constant dense<0.000000e+00> : vector<64x128xf32>
    %23 = tpu.matmul %21, %22, %cst_22 {dimension_numbers = #tpu.dot_dimension_numbers<[1], [0], [0], [1], [0, 0, 1, 1], [], []>} : vector<64x64xbf16>, vector<64x128xbf16>, vector<64x128xf32> -> vector<64x128xf32>
    %c0_23 = arith.constant 0 : index
    %c0_24 = arith.constant 0 : index
    %24 = vector.load %arg11[%c0_23, %c0_24] : memref<1x128xf32, #tpu.memory_space<vmem>>, vector<1x128xf32>
    %25 = vector.broadcast %24 : vector<1x128xf32> to vector<64x128xf32>
    %26 = arith.addf %23, %25 : vector<64x128xf32>
    %cst_25 = arith.constant 0.000000e+00 : f32
    %27 = vector.broadcast %cst_25 : f32 to vector<64x128xf32>
    %28 = arith.maximumf %26, %27 : vector<64x128xf32>
    %29 = arith.truncf %28 : vector<64x128xf32> to vector<64x128xbf16>
    %c0_26 = arith.constant 0 : index
    %c0_27 = arith.constant 0 : index
    %30 = vector.load %arg12[%c0_26, %c0_27] : memref<128x64xbf16, #tpu.memory_space<vmem>>, vector<128x64xbf16>
    %cst_28 = arith.constant dense<0.000000e+00> : vector<64x64xf32>
    %31 = tpu.matmul %29, %30, %cst_28 {dimension_numbers = #tpu.dot_dimension_numbers<[1], [0], [0], [1], [0, 0, 1, 1], [], []>} : vector<64x128xbf16>, vector<128x64xbf16>, vector<64x64xf32> -> vector<64x64xf32>
    %c0_29 = arith.constant 0 : index
    %c0_30 = arith.constant 0 : index
    %32 = vector.load %arg13[%c0_29, %c0_30] : memref<1x64xf32, #tpu.memory_space<vmem>>, vector<1x64xf32>
    %33 = vector.broadcast %32 : vector<1x64xf32> to vector<64x64xf32>
    %34 = arith.addf %31, %33 : vector<64x64xf32>
    %c0_31 = arith.constant 0 : index
    %c0_32 = arith.constant 0 : index
    %c0_33 = arith.constant 0 : index
    %35 = vector.load %arg4[%c0_31, %c0_32, %c0_33] : memref<1x1x64xf32, #tpu.memory_space<vmem>>, vector<1x1x64xf32>
    %36 = vector.shape_cast %35 : vector<1x1x64xf32> to vector<1x64xf32>
    %37 = vector.broadcast %36 : vector<1x64xf32> to vector<64x64xf32>
    %38 = arith.addf %34, %37 : vector<64x64xf32>
    %cst_34 = arith.constant 0.000000e+00 : f32
    %39 = vector.broadcast %cst_34 : f32 to vector<64x64xf32>
    %40 = arith.subf %39, %38 : vector<64x64xf32>
    %41 = math.exp %40 : vector<64x64xf32>
    %cst_35 = arith.constant 1.000000e+00 : f32
    %42 = vector.broadcast %cst_35 : f32 to vector<64x64xf32>
    %43 = arith.addf %42, %41 : vector<64x64xf32>
    %44 = tpu.reciprocal %43 {approx = true} : vector<64x64xf32> -> vector<64x64xf32>
    %45 = arith.subf %12, %4 : vector<64x64xf32>
    %46 = arith.mulf %44, %45 : vector<64x64xf32>
    %47 = arith.addf %4, %46 : vector<64x64xf32>
    %cst_36 = arith.constant 2.000000e+00 : f32
    %48 = vector.broadcast %cst_36 : f32 to vector<64x64xf32>
    %49 = arith.mulf %48, %47 : vector<64x64xf32>
    %c0_37 = arith.constant 0 : index
    %c0_38 = arith.constant 0 : index
    %c0_39 = arith.constant 0 : index
    %50 = vector.load %arg14[%c0_37, %c0_38, %c0_39] : memref<1x64x64xf32, #tpu.memory_space<vmem>>, vector<1x64x64xf32>
    %51 = vector.shape_cast %50 : vector<1x64x64xf32> to vector<64x64xf32>
    %52 = vector.shape_cast %49 : vector<64x64xf32> to vector<1x64x64xf32>
    tpu.vector_store %arg14[%c0_37, %c0_38, %c0_39], %52 {strides = array<i32>} : memref<1x64x64xf32, #tpu.memory_space<vmem>>, vector<1x64x64xf32>,
    return
  }
  func.func @transform_0(%arg0: i32, %arg1: i32) -> (i32, i32, i32) {
    %c0_i32 = arith.constant 0 : i32
    %c0_i32_0 = arith.constant 0 : i32
    return %arg0, %arg1, %c0_i32 : i32, i32, i32
  }
  func.func @transform_1(%arg0: i32, %arg1: i32) -> (i32, i32, i32) {
    %c0_i32 = arith.constant 0 : i32
    %c0_i32_0 = arith.constant 0 : i32
    return %arg0, %arg1, %c0_i32 : i32, i32, i32
  }
  func.func @transform_2(%arg0: i32, %arg1: i32) -> (i32, i32, i32) {
    %c0_i32 = arith.constant 0 : i32
    %c0_i32_0 = arith.constant 0 : i32
    %c0_i32_1 = arith.constant 0 : i32
    return %arg0, %c0_i32, %c0_i32_0 : i32, i32, i32
  }
  func.func @transform_3(%arg0: i32, %arg1: i32) -> (i32, i32) {
    %c0_i32 = arith.constant 0 : i32
    %c0_i32_0 = arith.constant 0 : i32
    %c0_i32_1 = arith.constant 0 : i32
    return %c0_i32, %c0_i32_0 : i32, i32
  }
  func.func @transform_4(%arg0: i32, %arg1: i32) -> (i32, i32) {
    %c0_i32 = arith.constant 0 : i32
    %c0_i32_0 = arith.constant 0 : i32
    %c0_i32_1 = arith.constant 0 : i32
    return %c0_i32, %c0_i32_0 : i32, i32
  }
  func.func @transform_5(%arg0: i32, %arg1: i32) -> (i32, i32) {
    %c0_i32 = arith.constant 0 : i32
    %c0_i32_0 = arith.constant 0 : i32
    %c0_i32_1 = arith.constant 0 : i32
    return %c0_i32, %c0_i32_0 : i32, i32
  }
  func.func @transform_6(%arg0: i32, %arg1: i32) -> (i32, i32) {
    %c0_i32 = arith.constant 0 : i32
    %c0_i32_0 = arith.constant 0 : i32
    %c0_i32_1 = arith.constant 0 : i32
    return %c0_i32, %c0_i32_0 : i32, i32
  }
  func.func @transform_7(%arg0: i32, %arg1: i32) -> (i32, i32) {
    %c0_i32 = arith.constant 0 : i32
    %c0_i32_0 = arith.constant 0 : i32
    %c0_i32_1 = arith.constant 0 : i32
    return %c0_i32, %c0_i32_0 : i32, i32
  }
  func.func @transform_8(%arg0: i32, %arg1: i32) -> (i32, i32) {
    %c0_i32 = arith.constant 0 : i32
    %c0_i32_0 = arith.constant 0 : i32
    %c0_i32_1 = arith.constant 0 : i32
    return %c0_i32, %c0_i32_0 : i32, i32
  }
  func.func @transform_9(%arg0: i32, %arg1: i32) -> (i32, i32) {
    %c0_i32 = arith.constant 0 : i32
    %c0_i32_0 = arith.constant 0 : i32
    %c0_i32_1 = arith.constant 0 : i32
    return %c0_i32, %c0_i32_0 : i32, i32
  }
  func.func @transform_10(%arg0: i32, %arg1: i32) -> (i32, i32) {
    %c0_i32 = arith.constant 0 : i32
    %c0_i32_0 = arith.constant 0 : i32
    %c0_i32_1 = arith.constant 0 : i32
    return %c0_i32, %c0_i32_0 : i32, i32
  }
  func.func @transform_11(%arg0: i32, %arg1: i32) -> (i32, i32) {
    %c0_i32 = arith.constant 0 : i32
    %c0_i32_0 = arith.constant 0 : i32
    %c0_i32_1 = arith.constant 0 : i32
    return %c0_i32, %c0_i32_0 : i32, i32
  }
  func.func @transform_12(%arg0: i32, %arg1: i32) -> (i32, i32, i32) {
    %c0_i32 = arith.constant 0 : i32
    %c0_i32_0 = arith.constant 0 : i32
    return %arg0, %arg1, %c0_i32 : i32, i32, i32
  }
}

</mosaic_0001>

<llo_original>
// kernel: avff_attention_nlc.1
$region0: #{avff_attention_nlc.1}
  #allocation0 [shape = 'u32[]', space=smem, size = 0x4, offset = 0x4, fixed_abs, tag = 'smem constant byte address 0x4 - core index']
  #allocation1 [shape = 'u32[144,128]{1,0:T(1,128)}', space=vmem, size = 0x12000, scoped, tag = 'internal scratch']
  %s0 = inlined_call_operand.vmem [shape: f32[2,64,128], index: 0, kind: input, shape index: {}]
  %s1 = inlined_call_operand.vmem [shape: f32[2,64,64], index: 1, kind: input, shape index: {}]
  %s2 = inlined_call_operand.vmem [shape: f32[2,1,64], index: 2, kind: input, shape index: {}]
  %s3 = inlined_call_operand.vmem [shape: bf16[128,64], index: 3, kind: input, shape index: {}]
  %s4 = inlined_call_operand.vmem [shape: f32[1,64], index: 4, kind: input, shape index: {}]
  %s5 = inlined_call_operand.vmem [shape: bf16[128,64], index: 5, kind: input, shape index: {}]
  %s6 = inlined_call_operand.vmem [shape: bf16[64,64], index: 6, kind: input, shape index: {}]
  %s7 = inlined_call_operand.vmem [shape: f32[1,64], index: 7, kind: input, shape index: {}]
  %s8 = inlined_call_operand.vmem [shape: bf16[64,128], index: 8, kind: input, shape index: {}]
  %s9 = inlined_call_operand.vmem [shape: f32[1,128], index: 9, kind: input, shape index: {}]
  %s10 = inlined_call_operand.vmem [shape: bf16[128,64], index: 10, kind: input, shape index: {}]
  %s11 = inlined_call_operand.vmem [shape: f32[1,64], index: 11, kind: input, shape index: {}]
  %s12 = inlined_call_operand.hbm [shape: f32[2,64,64], index: 12, kind: output, shape index: {}]
  %s13 = sld [smem:[#allocation0]]
  $region81: #{avff_attention_nlc.1} parent=0
    _
  %s15 = ssub.s32 1, %s13
  %s16 = scalar_select 0, %s15, %s13
  $region1: #{avff_attention_nlc.1} parent=0
    #allocation2 [shape = 'u8[65536]{0}', space=vmem, size = 0x10000, scoped, tag = 'output window, operand 0']
    #allocation3 [shape = 's32[2]{0}', space=sflag, size = 0x8, scoped, tag = 'scoped memory for avff_attention_nlc.1']
    %17 = vsyncpa [#allocation3], 0
    %s18 = scalar_lea.sflag [#allocation3], 1
    %19 = vsyncpa %s18, 0
    loop: start=0, step=1, limit=4
    $region2: #{avff_attention_nlc.1} parent=1 // loop_pre_header
      _
    $region3: #{avff_attention_nlc.1} parent=1 // loop_header
      %s21 = sphi 0, %s25
      %p22 = scmp.ge.s32.totalorder %s21, 4
      %s28 = sphi 0, %s40
      %s29 = sphi 0, %s36
      %s30 = sphi 0, %s28
      %s31 = sphi 0, %s29
      %s32 = sphi 0, %s30
      %s33 = sphi 0, %s31
      %s45 = sphi 0, %s47
      %s48 = sphi 0, %s45
      %s49 = sphi 0, %s48
      %s65 = sphi 0, %s49
      %s73 = sphi 0, %s75
      %s76 = sphi 0, %s73
      %s77 = sphi 0, %s76
      %s93 = sphi 0, %s77
      %s99 = sphi 0, %s101
      %s102 = sphi 0, %s99
      %s103 = sphi 0, %s102
      %s119 = sphi 0, %s103
      %s123 = sphi 0, %s123
      %s125 = sphi 0, %s123
      %s126 = sphi 0, %s125
      %s140 = sphi 0, %s126
      %s144 = sphi 0, %s144
      %s146 = sphi 0, %s144
      %s147 = sphi 0, %s146
      %s161 = sphi 0, %s147
      %s165 = sphi 0, %s165
      %s167 = sphi 0, %s165
      %s168 = sphi 0, %s167
      %s182 = sphi 0, %s168
      %s186 = sphi 0, %s186
      %s188 = sphi 0, %s186
      %s189 = sphi 0, %s188
      %s203 = sphi 0, %s189
      %s207 = sphi 0, %s207
      %s209 = sphi 0, %s207
      %s210 = sphi 0, %s209
      %s224 = sphi 0, %s210
      %s228 = sphi 0, %s228
      %s230 = sphi 0, %s228
      %s231 = sphi 0, %s230
      %s245 = sphi 0, %s231
      %s249 = sphi 0, %s249
      %s251 = sphi 0, %s249
      %s252 = sphi 0, %s251
      %s266 = sphi 0, %s252
      %s270 = sphi 0, %s270
      %s272 = sphi 0, %s270
      %s273 = sphi 0, %s272
      %s287 = sphi 0, %s273
      %s291 = sphi 0, %s291
      %s293 = sphi 0, %s291
      %s294 = sphi 0, %s293
      %s308 = sphi 0, %s294
      %s316 = sphi 0, %s318
      %s319 = sphi 0, %s316
      %s320 = sphi 0, %s319
      %s336 = sphi 0, %s320
    $region4: #{avff_attention_nlc.1} parent=1 // loop_header_branch
      %24 = sbr.rel (%p22) target = $region8
    $region5: #{avff_attention_nlc.1} parent=1 // loop_body
      %s26 = ssub.s32 %s21, 1
      %s27 = ssub.s32 %s21, 2
      %s34 = sadd.s32 1, %s29
      %p35 = scmp.ge.s32.totalorder %s34, 1
      %s36 = scalar_select %p35, 0, %s34
      %s37 = sadd.s32 1, %s28
      %s38 = scalar_select %p35, %s37, %s28
      %p39 = scmp.ge.s32.totalorder %s38, 2
      %s40 = scalar_select %p39, 0, %s38
      %s41 = ssub.s32 %s28, %s40
      %s42 = ssub.s32 %s29, %s36
      %s43 = sor.u32 %s41, %s42
      %p44 = scmp.eq.s32.totalorder %s43, 0
      %s46 = sadd.s32 %s45, 1
      %s47 = scalar_select %p44, %s45, %s46
      %p50 = pneg %p44
      %p51 = scmp.eq.s32.totalorder %s21, 1
      %p52 = por %p50, %p51
      %p53 = scmp.ne.s32.totalorder %s45, %s48
      %p54 = scmp.eq.s32.totalorder %s21, 0
      %p55 = por %p53, %p54
      %p56 = scmp.ne.s32.totalorder %s45, %s48
      %p57 = scmp.eq.s32.totalorder %s26, 1
      %p58 = por %p56, %p57
      %p59 = scmp.ne.s32.totalorder %s48, %s49
      %p60 = scmp.eq.s32.totalorder %s26, 0
      %p61 = por %p59, %p60
      %p62 = scmp.ne.s32.totalorder %s48, %s49
      %p63 = scmp.eq.s32.totalorder %s27, 1
      %p64 = por %p62, %p63
      %p66 = scmp.ne.s32.totalorder %s49, %s65
      %p67 = scmp.eq.s32.totalorder %s27, 0
      %p68 = por %p66, %p67
      %s69 = ssub.s32 %s28, %s40
      %s70 = ssub.s32 %s29, %s36
      %s71 = sor.u32 %s69, %s70
      %p72 = scmp.eq.s32.totalorder %s71, 0
      %s74 = sadd.s32 %s73, 1
      %s75 = scalar_select %p72, %s73, %s74
      %p78 = pneg %p72
      %p79 = scmp.eq.s32.totalorder %s21, 1
      %p80 = por %p78, %p79
      %p81 = scmp.ne.s32.totalorder %s73, %s76
      %p82 = scmp.eq.s32.totalorder %s21, 0
      %p83 = por %p81, %p82
      %p84 = scmp.ne.s32.totalorder %s73, %s76
      %p85 = scmp.eq.s32.totalorder %s26, 1
      %p86 = por %p84, %p85
      %p87 = scmp.ne.s32.totalorder %s76, %s77
      %p88 = scmp.eq.s32.totalorder %s26, 0
      %p89 = por %p87, %p88
      %p90 = scmp.ne.s32.totalorder %s76, %s77
      %p91 = scmp.eq.s32.totalorder %s27, 1
      %p92 = por %p90, %p91
      %p94 = scmp.ne.s32.totalorder %s77, %s93
      %p95 = scmp.eq.s32.totalorder %s27, 0
      %p96 = por %p94, %p95
      %s97 = ssub.s32 %s28, %s40
      %p98 = scmp.eq.s32.totalorder %s97, 0
      %s100 = sadd.s32 %s99, 1
      %s101 = scalar_select %p98, %s99, %s100
      %p104 = pneg %p98
      %p105 = scmp.eq.s32.totalorder %s21, 1
      %p106 = por %p104, %p105
      %p107 = scmp.ne.s32.totalorder %s99, %s102
      %p108 = scmp.eq.s32.totalorder %s21, 0
      %p109 = por %p107, %p108
      %p110 = scmp.ne.s32.totalorder %s99, %s102
      %p111 = scmp.eq.s32.totalorder %s26, 1
      %p112 = por %p110, %p111
      %p113 = scmp.ne.s32.totalorder %s102, %s103
      %p114 = scmp.eq.s32.totalorder %s26, 0
      %p115 = por %p113, %p114
      %p116 = scmp.ne.s32.totalorder %s102, %s103
      %p117 = scmp.eq.s32.totalorder %s27, 1
      %p118 = por %p116, %p117
      %p120 = scmp.ne.s32.totalorder %s103, %s119
      %p121 = scmp.eq.s32.totalorder %s27, 0
      %p122 = por %p120, %p121
      %s124 = sadd.s32 %s123, 1
      %p127 = scmp.eq.s32.totalorder %s21, 1
      %p128 = scmp.ne.s32.totalorder %s123, %s125
      %p129 = scmp.eq.s32.totalorder %s21, 0
      %p130 = por %p128, %p129
      %p131 = scmp.ne.s32.totalorder %s123, %s125
      %p132 = scmp.eq.s32.totalorder %s26, 1
      %p133 = por %p131, %p132
      %p134 = scmp.ne.s32.totalorder %s125, %s126
      %p135 = scmp.eq.s32.totalorder %s26, 0
      %p136 = por %p134, %p135
      %p137 = scmp.ne.s32.totalorder %s125, %s126
      %p138 = scmp.eq.s32.totalorder %s27, 1
      %p139 = por %p137, %p138
      %p141 = scmp.ne.s32.totalorder %s126, %s140
      %p142 = scmp.eq.s32.totalorder %s27, 0
      %p143 = por %p141, %p142
      %s145 = sadd.s32 %s144, 1
      %p148 = scmp.eq.s32.totalorder %s21, 1
      %p149 = scmp.ne.s32.totalorder %s144, %s146
      %p150 = scmp.eq.s32.totalorder %s21, 0
      %p151 = por %p149, %p150
      %p152 = scmp.ne.s32.totalorder %s144, %s146
      %p153 = scmp.eq.s32.totalorder %s26, 1
      %p154 = por %p152, %p153
      %p155 = scmp.ne.s32.totalorder %s146, %s147
      %p156 = scmp.eq.s32.totalorder %s26, 0
      %p157 = por %p155, %p156
      %p158 = scmp.ne.s32.totalorder %s146, %s147
      %p159 = scmp.eq.s32.totalorder %s27, 1
      %p160 = por %p158, %p159
      %p162 = scmp.ne.s32.totalorder %s147, %s161
      %p163 = scmp.eq.s32.totalorder %s27, 0
      %p164 = por %p162, %p163
      %s166 = sadd.s32 %s165, 1
      %p169 = scmp.eq.s32.totalorder %s21, 1
      %p170 = scmp.ne.s32.totalorder %s165, %s167
      %p171 = scmp.eq.s32.totalorder %s21, 0
      %p172 = por %p170, %p171
      %p173 = scmp.ne.s32.totalorder %s165, %s167
      %p174 = scmp.eq.s32.totalorder %s26, 1
      %p175 = por %p173, %p174
      %p176 = scmp.ne.s32.totalorder %s167, %s168
      %p177 = scmp.eq.s32.totalorder %s26, 0
      %p178 = por %p176, %p177
      %p179 = scmp.ne.s32.totalorder %s167, %s168
      %p180 = scmp.eq.s32.totalorder %s27, 1
      %p181 = por %p179, %p180
      %p183 = scmp.ne.s32.totalorder %s168, %s182
      %p184 = scmp.eq.s32.totalorder %s27, 0
      %p185 = por %p183, %p184
      %s187 = sadd.s32 %s186, 1
      %p190 = scmp.eq.s32.totalorder %s21, 1
      %p191 = scmp.ne.s32.totalorder %s186, %s188
      %p192 = scmp.eq.s32.totalorder %s21, 0
      %p193 = por %p191, %p192
      %p194 = scmp.ne.s32.totalorder %s186, %s188
      %p195 = scmp.eq.s32.totalorder %s26, 1
      %p196 = por %p194, %p195
      %p197 = scmp.ne.s32.totalorder %s188, %s189
      %p198 = scmp.eq.s32.totalorder %s26, 0
      %p199 = por %p197, %p198
      %p200 = scmp.ne.s32.totalorder %s188, %s189
      %p201 = scmp.eq.s32.totalorder %s27, 1
      %p202 = por %p200, %p201
      %p204 = scmp.ne.s32.totalorder %s189, %s203
      %p205 = scmp.eq.s32.totalorder %s27, 0
      %p206 = por %p204, %p205
      %s208 = sadd.s32 %s207, 1
      %p211 = scmp.eq.s32.totalorder %s21, 1
      %p212 = scmp.ne.s32.totalorder %s207, %s209
      %p213 = scmp.eq.s32.totalorder %s21, 0
      %p214 = por %p212, %p213
      %p215 = scmp.ne.s32.totalorder %s207, %s209
      %p216 = scmp.eq.s32.totalorder %s26, 1
      %p217 = por %p215, %p216
      %p218 = scmp.ne.s32.totalorder %s209, %s210
      %p219 = scmp.eq.s32.totalorder %s26, 0
      %p220 = por %p218, %p219
      %p221 = scmp.ne.s32.totalorder %s209, %s210
      %p222 = scmp.eq.s32.totalorder %s27, 1
      %p223 = por %p221, %p222
      %p225 = scmp.ne.s32.totalorder %s210, %s224
      %p226 = scmp.eq.s32.totalorder %s27, 0
      %p227 = por %p225, %p226
      %s229 = sadd.s32 %s228, 1
      %p232 = scmp.eq.s32.totalorder %s21, 1
      %p233 = scmp.ne.s32.totalorder %s228, %s230
      %p234 = scmp.eq.s32.totalorder %s21, 0
      %p235 = por %p233, %p234
      %p236 = scmp.ne.s32.totalorder %s228, %s230
      %p237 = scmp.eq.s32.totalorder %s26, 1
      %p238 = por %p236, %p237
      %p239 = scmp.ne.s32.totalorder %s230, %s231
      %p240 = scmp.eq.s32.totalorder %s26, 0
      %p241 = por %p239, %p240
      %p242 = scmp.ne.s32.totalorder %s230, %s231
      %p243 = scmp.eq.s32.totalorder %s27, 1
      %p244 = por %p242, %p243
      %p246 = scmp.ne.s32.totalorder %s231, %s245
      %p247 = scmp.eq.s32.totalorder %s27, 0
      %p248 = por %p246, %p247
      %s250 = sadd.s32 %s249, 1
      %p253 = scmp.eq.s32.totalorder %s21, 1
      %p254 = scmp.ne.s32.totalorder %s249, %s251
      %p255 = scmp.eq.s32.totalorder %s21, 0
      %p256 = por %p254, %p255
      %p257 = scmp.ne.s32.totalorder %s249, %s251
      %p258 = scmp.eq.s32.totalorder %s26, 1
      %p259 = por %p257, %p258
      %p260 = scmp.ne.s32.totalorder %s251, %s252
      %p261 = scmp.eq.s32.totalorder %s26, 0
      %p262 = por %p260, %p261
      %p263 = scmp.ne.s32.totalorder %s251, %s252
      %p264 = scmp.eq.s32.totalorder %s27, 1
      %p265 = por %p263, %p264
      %p267 = scmp.ne.s32.totalorder %s252, %s266
      %p268 = scmp.eq.s32.totalorder %s27, 0
      %p269 = por %p267, %p268
      %s271 = sadd.s32 %s270, 1
      %p274 = scmp.eq.s32.totalorder %s21, 1
      %p275 = scmp.ne.s32.totalorder %s270, %s272
      %p276 = scmp.eq.s32.totalorder %s21, 0
      %p277 = por %p275, %p276
      %p278 = scmp.ne.s32.totalorder %s270, %s272
      %p279 = scmp.eq.s32.totalorder %s26, 1
      %p280 = por %p278, %p279
      %p281 = scmp.ne.s32.totalorder %s272, %s273
      %p282 = scmp.eq.s32.totalorder %s26, 0
      %p283 = por %p281, %p282
      %p284 = scmp.ne.s32.totalorder %s272, %s273
      %p285 = scmp.eq.s32.totalorder %s27, 1
      %p286 = por %p284, %p285
      %p288 = scmp.ne.s32.totalorder %s273, %s287
      %p289 = scmp.eq.s32.totalorder %s27, 0
      %p290 = por %p288, %p289
      %s292 = sadd.s32 %s291, 1
      %p295 = scmp.eq.s32.totalorder %s21, 1
      %p296 = scmp.ne.s32.totalorder %s291, %s293
      %p297 = scmp.eq.s32.totalorder %s21, 0
      %p298 = por %p296, %p297
      %p299 = scmp.ne.s32.totalorder %s291, %s293
      %p300 = scmp.eq.s32.totalorder %s26, 1
      %p301 = por %p299, %p300
      %p302 = scmp.ne.s32.totalorder %s293, %s294
      %p303 = scmp.eq.s32.totalorder %s26, 0
      %p304 = por %p302, %p303
      %p305 = scmp.ne.s32.totalorder %s293, %s294
      %p306 = scmp.eq.s32.totalorder %s27, 1
      %p307 = por %p305, %p306
      %p309 = scmp.ne.s32.totalorder %s294, %s308
      %p310 = scmp.eq.s32.totalorder %s27, 0
      %p311 = por %p309, %p310
      %s312 = ssub.s32 %s28, %s40
      %s313 = ssub.s32 %s29, %s36
      %s314 = sor.u32 %s312, %s313
      %p315 = scmp.eq.s32.totalorder %s314, 0
      %s317 = sadd.s32 %s316, 1
      %s318 = scalar_select %p315, %s316, %s317
      %p321 = pneg %p315
      %p322 = scmp.eq.s32.totalorder %s21, 1
      %p323 = por %p321, %p322
      %p324 = scmp.ne.s32.totalorder %s316, %s319
      %p325 = scmp.eq.s32.totalorder %s21, 0
      %p326 = por %p324, %p325
      %p327 = scmp.ne.s32.totalorder %s316, %s319
      %p328 = scmp.eq.s32.totalorder %s26, 1
      %p329 = por %p327, %p328
      %p330 = scmp.ne.s32.totalorder %s319, %s320
      %p331 = scmp.eq.s32.totalorder %s26, 0
      %p332 = por %p330, %p331
      %p333 = scmp.ne.s32.totalorder %s319, %s320
      %p334 = scmp.eq.s32.totalorder %s27, 1
      %p335 = por %p333, %p334
      %p337 = scmp.ne.s32.totalorder %s320, %s336
      %p338 = scmp.eq.s32.totalorder %s27, 0
      %p339 = por %p337, %p338
      %p340 = scmp.le.s32.totalorder 1, %s21
      %p341 = scmp.lt.s32.totalorder %s21, 3
      %p342 = pnand %p340, %p341
      %p343 = pneg %p342
      // Predicated region
      $region9: #{avff_attention_nlc.1} parent=5 // pred_check
        _
      $region10: #{avff_attention_nlc.1} parent=5 // pred_check_branch
        %345 = sbr.rel (%p342) target = $region12
      $region11: #{avff_attention_nlc.1} parent=5 // pred_region
        %s346 = ssub.s32 %s21, 1
        // Predicated region
        $region13: #{avff_attention_nlc.1} parent=11 // pred_check
          %p347 = pneg %p136
        $region14: #{avff_attention_nlc.1} parent=11 // pred_check_branch
          %349 = sbr.rel (%p347) target = $region16
        $region15: #{avff_attention_nlc.1} parent=11 // pred_region
          _
        $region16: #{avff_attention_nlc.1} parent=11 // pred_fallthru
          _
        // Predicated region
        $region17: #{avff_attention_nlc.1} parent=11 // pred_check
          %p350 = pneg %p157
        $region18: #{avff_attention_nlc.1} parent=11 // pred_check_branch
          %352 = sbr.rel (%p350) target = $region20
        $region19: #{avff_attention_nlc.1} parent=11 // pred_region
          _
        $region20: #{avff_attention_nlc.1} parent=11 // pred_fallthru
          _
        // Predicated region
        $region21: #{avff_attention_nlc.1} parent=11 // pred_check
          %p353 = pneg %p178
        $region22: #{avff_attention_nlc.1} parent=11 // pred_check_branch
          %355 = sbr.rel (%p353) target = $region24
        $region23: #{avff_attention_nlc.1} parent=11 // pred_region
          _
        $region24: #{avff_attention_nlc.1} parent=11 // pred_fallthru
          _
        // Predicated region
        $region25: #{avff_attention_nlc.1} parent=11 // pred_check
          %p356 = pneg %p199
        $region26: #{avff_attention_nlc.1} parent=11 // pred_check_branch
          %358 = sbr.rel (%p356) target = $region28
        $region27: #{avff_attention_nlc.1} parent=11 // pred_region
          _
        $region28: #{avff_attention_nlc.1} parent=11 // pred_fallthru
          _
        // Predicated region
        $region29: #{avff_attention_nlc.1} parent=11 // pred_check
          %p359 = pneg %p220
        $region30: #{avff_attention_nlc.1} parent=11 // pred_check_branch
          %361 = sbr.rel (%p359) target = $region32
        $region31: #{avff_attention_nlc.1} parent=11 // pred_region
          _
        $region32: #{avff_attention_nlc.1} parent=11 // pred_fallthru
          _
        // Predicated region
        $region33: #{avff_attention_nlc.1} parent=11 // pred_check
          %p362 = pneg %p241
        $region34: #{avff_attention_nlc.1} parent=11 // pred_check_branch
          %364 = sbr.rel (%p362) target = $region36
        $region35: #{avff_attention_nlc.1} parent=11 // pred_region
          _
        $region36: #{avff_attention_nlc.1} parent=11 // pred_fallthru
          _
        // Predicated region
        $region37: #{avff_attention_nlc.1} parent=11 // pred_check
          %p365 = pneg %p262
        $region38: #{avff_attention_nlc.1} parent=11 // pred_check_branch
          %367 = sbr.rel (%p365) target = $region40
        $region39: #{avff_attention_nlc.1} parent=11 // pred_region
          _
        $region40: #{avff_attention_nlc.1} parent=11 // pred_fallthru
          _
        // Predicated region
        $region41: #{avff_attention_nlc.1} parent=11 // pred_check
          %p368 = pneg %p283
        $region42: #{avff_attention_nlc.1} parent=11 // pred_check_branch
          %370 = sbr.rel (%p368) target = $region44
        $region43: #{avff_attention_nlc.1} parent=11 // pred_region
          _
        $region44: #{avff_attention_nlc.1} parent=11 // pred_fallthru
          _
        // Predicated region
        $region45: #{avff_attention_nlc.1} parent=11 // pred_check
          %p371 = pneg %p304
        $region46: #{avff_attention_nlc.1} parent=11 // pred_check_branch
          %373 = sbr.rel (%p371) target = $region48
        $region47: #{avff_attention_nlc.1} parent=11 // pred_region
          _
        $region48: #{avff_attention_nlc.1} parent=11 // pred_fallthru
          _
      $region12: #{avff_attention_nlc.1} parent=5 // pred_fallthru
        _
      %p374 = scmp.lt.s32.totalorder %s21, 2
      // Predicated region
      $region49: #{avff_attention_nlc.1} parent=5 // pred_check
        %p375 = pneg %p374
      $region50: #{avff_attention_nlc.1} parent=5 // pred_check_branch
        %377 = sbr.rel (%p375) target = $region52
      $region51: #{avff_attention_nlc.1} parent=5 // pred_region
        // Predicated region
        $region53: #{avff_attention_nlc.1} parent=51 // pred_check
          %p378 = pneg %p55
        $region54: #{avff_attention_nlc.1} parent=51 // pred_check_branch
          %380 = sbr.rel (%p378) target = $region56
        $region55: #{avff_attention_nlc.1} parent=51 // pred_region
          %s381 = smul.u32 8, %s29
          %p382 = scmp.lt.s32.totalorder %s28, 1
          %s383 = scalar_select %p382, %s28, 1
          %p384 = scmp.lt.s32.totalorder %s381, 7
          %s385 = scalar_select %p384, %s381, 7
          %s386 = smul.addr %s383, 8
          %s387 = sadd.s32 %s385, %s386
          %s388 = smul.addr %s387, 8
          %s389 = scalar_lea.vmem %s0, %s388
          %s390 = smul.u32 8, %s29
        $region56: #{avff_attention_nlc.1} parent=51 // pred_fallthru
          _
        // Predicated region
        $region57: #{avff_attention_nlc.1} parent=51 // pred_check
          %p391 = pneg %p83
        $region58: #{avff_attention_nlc.1} parent=51 // pred_check_branch
          %393 = sbr.rel (%p391) target = $region60
        $region59: #{avff_attention_nlc.1} parent=51 // pred_region
          %s394 = smul.u32 8, %s29
          %p395 = scmp.lt.s32.totalorder %s28, 1
          %s396 = scalar_select %p395, %s28, 1
          %p397 = scmp.lt.s32.totalorder %s394, 7
          %s398 = scalar_select %p397, %s394, 7
          %s399 = smul.addr %s396, 8
          %s400 = sadd.s32 %s398, %s399
          %s401 = smul.addr %s400, 8
          %s402 = scalar_lea.vmem %s1, %s401
          %s403 = smul.u32 8, %s29
        $region60: #{avff_attention_nlc.1} parent=51 // pred_fallthru
          _
        // Predicated region
        $region61: #{avff_attention_nlc.1} parent=51 // pred_check
          %p404 = pneg %p109
        $region62: #{avff_attention_nlc.1} parent=51 // pred_check_branch
          %406 = sbr.rel (%p404) target = $region64
        $region63: #{avff_attention_nlc.1} parent=51 // pred_region
          %p407 = scmp.lt.s32.totalorder %s28, 1
          %s408 = scalar_select %p407, %s28, 1
          %s409 = scalar_lea.vmem %s2, %s408
        $region64: #{avff_attention_nlc.1} parent=51 // pred_fallthru
          _
      $region52: #{avff_attention_nlc.1} parent=5 // pred_fallthru
        _
      %p410 = scmp.le.s32.totalorder 1, %s21
      %p411 = scmp.lt.s32.totalorder %s21, 3
      %p412 = pnand %p410, %p411
      %p413 = pneg %p412
      // Predicated region
      $region65: #{avff_attention_nlc.1} parent=5 // pred_check
        _
      $region66: #{avff_attention_nlc.1} parent=5 // pred_check_branch
        %415 = sbr.rel (%p412) target = $region68
      $region67: #{avff_attention_nlc.1} parent=5 // pred_region
        %s416 = ssub.s32 %s21, 1
        %s417 = smul.u32 8, %s31
        %p418 = scmp.lt.s32.totalorder %s30, 1
        %s419 = scalar_select %p418, %s30, 1
        %p420 = scmp.lt.s32.totalorder %s417, 7
        %s421 = scalar_select %p420, %s417, 7
        %s422 = smul.addr %s419, 8
        %s423 = sadd.s32 %s421, %s422
        %s424 = smul.addr %s423, 8
        %s425 = scalar_lea.vmem %s0, %s424
        %p426 = pneg %p61
        %p427 = pneg %p58
        %s428 = smul.u32 8, %s31
        %p429 = scmp.lt.s32.totalorder %s30, 1
        %s430 = scalar_select %p429, %s30, 1
        %p431 = scmp.lt.s32.totalorder %s428, 7
        %s432 = scalar_select %p431, %s428, 7
        %s433 = smul.addr %s430, 8
        %s434 = sadd.s32 %s432, %s433
        %s435 = smul.addr %s434, 8
        %s436 = scalar_lea.vmem %s1, %s435
        %p437 = pneg %p89
        %p438 = pneg %p86
        %p439 = scmp.lt.s32.totalorder %s30, 1
        %s440 = scalar_select %p439, %s30, 1
        %s441 = scalar_lea.vmem %s2, %s440
        %p442 = pneg %p115
        %p443 = pneg %p112
        %p444 = pneg %p136
        %p445 = pneg %p133
        %p446 = pneg %p157
        %p447 = pneg %p154
        %p448 = pneg %p178
        %p449 = pneg %p175
        %p450 = pneg %p199
        %p451 = pneg %p196
        %p452 = pneg %p220
        %p453 = pneg %p217
        %p454 = pneg %p241
        %p455 = pneg %p238
        %p456 = pneg %p262
        %p457 = pneg %p259
        %p458 = pneg %p283
        %p459 = pneg %p280
        %p460 = pneg %p304
        %p461 = pneg %p301
        %p462 = pneg %p332
        %p463 = pneg %p329
        %s464 = sand.u32 %s319, 1
        %s465 = scalar_lea.sflag [#allocation3], %s464
        %s466 = sand.u32 %s319, 1
        %s467 = smul.addr %s466, 64
        %s468 = scalar_lea.vmem [#allocation2], %s467
        %s469 = smul.u32 8, %s31
        %p470 = scmp.lt.s32.totalorder %s30, 1
        %s471 = scalar_select %p470, %s30, 1
        %p472 = scmp.lt.s32.totalorder %s469, 7
        %s473 = scalar_select %p472, %s469, 7
        %s474 = smul.addr %s471, 8
        %s475 = sadd.s32 %s473, %s474
        %s476 = smul.addr %s475, 8
        %s477 = scalar_lea.vmem %s0, %s476
        %s478 = smul.u32 8, %s31
        %s479 = smul.u32 8, %s31
        %p480 = scmp.lt.s32.totalorder %s30, 1
        %s481 = scalar_select %p480, %s30, 1
        %p482 = scmp.lt.s32.totalorder %s479, 7
        %s483 = scalar_select %p482, %s479, 7
        %s484 = smul.addr %s481, 8
        %s485 = sadd.s32 %s483, %s484
        %s486 = smul.addr %s485, 8
        %s487 = scalar_lea.vmem %s1, %s486
        %s488 = smul.u32 8, %s31
        %p489 = scmp.lt.s32.totalorder %s30, 1
        %s490 = scalar_select %p489, %s30, 1
        %s491 = scalar_lea.vmem %s2, %s490
        %s492 = smul.u32 8, %s31
        %v494 = vld [vmem:[%s477] sm:$0xff]
        %v495 = vld [vmem:[%s477 + $0x8] sm:$0xff]
        %v496 = vld [vmem:[%s477 + $0x10] sm:$0xff]
        %v497 = vld [vmem:[%s477 + $0x18] sm:$0xff]
        %v498 = vld [vmem:[%s477 + $0x20] sm:$0xff]
        %v499 = vld [vmem:[%s477 + $0x28] sm:$0xff]
        %v500 = vld [vmem:[%s477 + $0x30] sm:$0xff]
        %v501 = vld [vmem:[%s477 + $0x38] sm:$0xff]
        %v502 = vpack.c.bf16 %v495, %v494
        %v503 = vpack.c.bf16 %v497, %v496
        %v504 = vpack.c.bf16 %v499, %v498
        %v505 = vpack.c.bf16 %v501, %v500
        %v506 = vld [vmem:[%s487] sm:$0xff]
        %v507 = vld [vmem:[%s487 + $0x8] sm:$0xff]
        %v508 = vld [vmem:[%s487 + $0x10] sm:$0xff]
        %v509 = vld [vmem:[%s487 + $0x18] sm:$0xff]
        %v510 = vld [vmem:[%s487 + $0x20] sm:$0xff]
        %v511 = vld [vmem:[%s487 + $0x28] sm:$0xff]
        %v512 = vld [vmem:[%s487 + $0x30] sm:$0xff]
        %v513 = vld [vmem:[%s487 + $0x38] sm:$0xff]
        %v514 = vpack.c.bf16 %v507, %v506
        %v515 = vpack.c.bf16 %v509, %v508
        %v516 = vpack.c.bf16 %v511, %v510
        %v517 = vpack.c.bf16 %v513, %v512
        %v518 = vld [vmem:[%s3] sm:$0xf]
        %v519 = vld [vmem:[%s3 + $0x4] sm:$0xf]
        %v520 = vld [vmem:[%s3 + $0x8] sm:$0xf]
        %v521 = vld [vmem:[%s3 + $0xc] sm:$0xf]
        %v522 = vld [vmem:[%s3 + $0x10] sm:$0xf]
        %v523 = vld [vmem:[%s3 + $0x14] sm:$0xf]
        %v524 = vld [vmem:[%s3 + $0x18] sm:$0xf]
        %v525 = vld [vmem:[%s3 + $0x1c] sm:$0xf]
        %v526 = vld [vmem:[%s3 + $0x20] sm:$0xf]
        %v527 = vld [vmem:[%s3 + $0x24] sm:$0xf]
        %v528 = vld [vmem:[%s3 + $0x28] sm:$0xf]
        %v529 = vld [vmem:[%s3 + $0x2c] sm:$0xf]
        %v530 = vld [vmem:[%s3 + $0x30] sm:$0xf]
        %v531 = vld [vmem:[%s3 + $0x34] sm:$0xf]
        %v532 = vld [vmem:[%s3 + $0x38] sm:$0xf]
        %v533 = vld [vmem:[%s3 + $0x3c] sm:$0xf]
        %v534 = vld [vmem:[%s4] sm:$0x1]
        %v536 = vlaneseq
        %v537 = vshrl.u32 %v536, 7
        %v538 = vsub.s32 0, %v537
        %v539 = vrot.slane %v534, %v538
        %v557 = vunpack.c.l.b16 %v518
        %v558 = vunpack.c.l.b16 %v519
        %v559 = vunpack.c.l.b16 %v520
        %v560 = vunpack.c.l.b16 %v521
        %v561 = vunpack.c.l.b16 %v522
        %v562 = vunpack.c.l.b16 %v523
        %v563 = vunpack.c.l.b16 %v524
        %v564 = vunpack.c.l.b16 %v525
        %v565 = vunpack.c.l.b16 %v526
        %v566 = vunpack.c.l.b16 %v527
        %v567 = vunpack.c.l.b16 %v528
        %v568 = vunpack.c.l.b16 %v529
        %v569 = vunpack.c.l.b16 %v530
        %v570 = vunpack.c.l.b16 %v531
        %v571 = vunpack.c.l.b16 %v532
        %v572 = vunpack.c.l.b16 %v533
        %v573 = vpack.c.b16 %v558, %v557
        %v574 = vpack.c.b16 %v560, %v559
        %v575 = vpack.c.b16 %v562, %v561
        %v576 = vpack.c.b16 %v564, %v563
        %v577 = vpack.c.b16 %v566, %v565
        %v578 = vpack.c.b16 %v568, %v567
        %v579 = vpack.c.b16 %v570, %v569
        %v580 = vpack.c.b16 %v572, %v571
        %589 = vmatprep.subr.bf16.mxu0 0
        %590 = vmatpush1.bf16.msra.mxu0 %v580
        %591 = vmatprep.subr.bf16.mxu0 0
        %592 = vmatpush1.bf16.msra.mxu0 %v579
        %593 = vmatprep.subr.bf16.mxu0 0
        %594 = vmatpush1.bf16.msra.mxu0 %v578
        %595 = vmatprep.subr.bf16.mxu0 0
        %596 = vmatpush1.bf16.msra.mxu0 %v577
        %597 = vmatprep.subr.bf16.mxu0 0
        %598 = vmatpush1.bf16.msra.mxu0 %v576
        %599 = vmatprep.subr.bf16.mxu0 0
        %600 = vmatpush1.bf16.msra.mxu0 %v575
        %601 = vmatprep.subr.bf16.mxu0 0
        %602 = vmatpush1.bf16.msra.mxu0 %v574
        %603 = vmatprep.subr.bf16.mxu0 0
        %604 = vmatpush1.bf16.msra.mxu0 %v573
        %605 = vmatprep.subr.bf16.mxu0 0
        %606 = vmatpush2.bf16.msra.mxu0 0
        %607 = vmatprep.subr.bf16.mxu0 0
        %608 = vmatpush2.bf16.msra.mxu0 0
        %609 = vmatprep.subr.bf16.mxu0 0
        %610 = vmatpush2.bf16.msra.mxu0 0
        %611 = vmatprep.subr.bf16.mxu0 0
        %612 = vmatpush2.bf16.msra.mxu0 0
        %613 = vmatprep.subr.bf16.mxu0 0
        %614 = vmatpush2.bf16.msra.mxu0 0
        %615 = vmatprep.subr.bf16.mxu0 0
        %616 = vmatpush2.bf16.msra.mxu0 0
        %617 = vmatprep.subr.bf16.mxu0 0
        %618 = vmatpush2.bf16.msra.mxu0 0
        %619 = vmatprep.subr.bf16.mxu0 0
        %620 = vmatpush2.bf16.msra.mxu0 0
        %621 = vmatprep.mubr.bf16.mxu0 0
        %622 = vmatmul.mubr.bf16.gmra.mxu0 %v502
        %v623 = vpop.f32.mrf.mxu0
        %v624 = vadd.f32 %v539, %v623
        %v625 = vpop.f32.mrf.mxu0
        %v626 = vpop.f32.mrf.mxu0
        %v627 = vadd.f32 %v539, %v626
        %v628 = vpop.f32.mrf.mxu0
        %629 = vmatprep.mubr.bf16.mxu0 0
        %630 = vmatmul.mubr.bf16.gmra.mxu0 %v503
        %v631 = vpop.f32.mrf.mxu0
        %v632 = vadd.f32 %v539, %v631
        %v633 = vpop.f32.mrf.mxu0
        %v634 = vpop.f32.mrf.mxu0
        %v635 = vadd.f32 %v539, %v634
        %v636 = vpop.f32.mrf.mxu0
        %637 = vmatprep.mubr.bf16.mxu0 0
        %638 = vmatmul.mubr.bf16.gmra.mxu0 %v504
        %v639 = vpop.f32.mrf.mxu0
        %v640 = vadd.f32 %v539, %v639
        %v641 = vpop.f32.mrf.mxu0
        %v642 = vpop.f32.mrf.mxu0
        %v643 = vadd.f32 %v539, %v642
        %v644 = vpop.f32.mrf.mxu0
        %645 = vmatprep.mubr.bf16.mxu0 0
        %646 = vmatmul.mubr.bf16.gmra.mxu0 %v505
        %v647 = vpop.f32.mrf.mxu0
        %v648 = vadd.f32 %v539, %v647
        %v649 = vpop.f32.mrf.mxu0
        %v650 = vpop.f32.mrf.mxu0
        %v651 = vadd.f32 %v539, %v650
        %v652 = vpop.f32.mrf.mxu0
        %653 = vdwg.mxu0
        %v654 = vld [vmem:[%s5] sm:$0xf]
        %v655 = vld [vmem:[%s5 + $0x4] sm:$0xf]
        %v656 = vld [vmem:[%s5 + $0x8] sm:$0xf]
        %v657 = vld [vmem:[%s5 + $0xc] sm:$0xf]
        %v658 = vld [vmem:[%s5 + $0x10] sm:$0xf]
        %v659 = vld [vmem:[%s5 + $0x14] sm:$0xf]
        %v660 = vld [vmem:[%s5 + $0x18] sm:$0xf]
        %v661 = vld [vmem:[%s5 + $0x1c] sm:$0xf]
        %v662 = vld [vmem:[%s5 + $0x20] sm:$0xf]
        %v663 = vld [vmem:[%s5 + $0x24] sm:$0xf]
        %v664 = vld [vmem:[%s5 + $0x28] sm:$0xf]
        %v665 = vld [vmem:[%s5 + $0x2c] sm:$0xf]
        %v666 = vld [vmem:[%s5 + $0x30] sm:$0xf]
        %v667 = vld [vmem:[%s5 + $0x34] sm:$0xf]
        %v668 = vld [vmem:[%s5 + $0x38] sm:$0xf]
        %v669 = vld [vmem:[%s5 + $0x3c] sm:$0xf]
        %v670 = vld [vmem:[%s6] sm:$0xf]
        %v671 = vld [vmem:[%s6 + $0x4] sm:$0xf]
        %v672 = vld [vmem:[%s6 + $0x8] sm:$0xf]
        %v673 = vld [vmem:[%s6 + $0xc] sm:$0xf]
        %v674 = vld [vmem:[%s6 + $0x10] sm:$0xf]
        %v675 = vld [vmem:[%s6 + $0x14] sm:$0xf]
        %v676 = vld [vmem:[%s6 + $0x18] sm:$0xf]
        %v677 = vld [vmem:[%s6 + $0x1c] sm:$0xf]
        %v686 = vunpack.c.l.b16 %v670
        %v687 = vunpack.c.l.b16 %v671
        %v688 = vunpack.c.l.b16 %v672
        %v689 = vunpack.c.l.b16 %v673
        %v690 = vunpack.c.l.b16 %v674
        %v691 = vunpack.c.l.b16 %v675
        %v692 = vunpack.c.l.b16 %v676
        %v693 = vunpack.c.l.b16 %v677
        %v694 = vpack.c.b16 %v687, %v686
        %v695 = vpack.c.b16 %v689, %v688
        %v696 = vpack.c.b16 %v691, %v690
        %v697 = vpack.c.b16 %v693, %v692
        %vm702 = vcmask 523264
        %v704 = vsel %vm702, %v514, 0
        %v707 = vsel %vm702, %v515, 0
        %v710 = vsel %vm702, %v516, 0
        %v713 = vsel %vm702, %v517, 0
        %715 = vmatprep.subr.bf16.mxu0 0
        %716 = vmatpush1.bf16.msra.mxu0 0
        %717 = vmatprep.subr.bf16.mxu0 0
        %718 = vmatpush1.bf16.msra.mxu0 0
        %719 = vmatprep.subr.bf16.mxu0 0
        %720 = vmatpush1.bf16.msra.mxu0 0
        %721 = vmatprep.subr.bf16.mxu0 0
        %722 = vmatpush1.bf16.msra.mxu0 0
        %723 = vmatprep.subr.bf16.mxu0 0
        %724 = vmatpush1.bf16.msra.mxu0 %v697
        %725 = vmatprep.subr.bf16.mxu0 0
        %726 = vmatpush1.bf16.msra.mxu0 %v696
        %727 = vmatprep.subr.bf16.mxu0 0
        %728 = vmatpush1.bf16.msra.mxu0 %v695
        %729 = vmatprep.subr.bf16.mxu0 0
        %730 = vmatpush1.bf16.msra.mxu0 %v694
        %731 = vmatprep.subr.bf16.mxu0 0
        %732 = vmatpush2.bf16.msra.mxu0 0
        %733 = vmatprep.subr.bf16.mxu0 0
        %734 = vmatpush2.bf16.msra.mxu0 0
        %735 = vmatprep.subr.bf16.mxu0 0
        %736 = vmatpush2.bf16.msra.mxu0 0
        %737 = vmatprep.subr.bf16.mxu0 0
        %738 = vmatpush2.bf16.msra.mxu0 0
        %739 = vmatprep.subr.bf16.mxu0 0
        %740 = vmatpush2.bf16.msra.mxu0 0
        %741 = vmatprep.subr.bf16.mxu0 0
        %742 = vmatpush2.bf16.msra.mxu0 0
        %743 = vmatprep.subr.bf16.mxu0 0
        %744 = vmatpush2.bf16.msra.mxu0 0
        %745 = vmatprep.subr.bf16.mxu0 0
        %746 = vmatpush2.bf16.msra.mxu0 0
        %747 = vmatprep.mubr.bf16.mxu0 0
        %748 = vmatmul.mubr.bf16.gmra.mxu0 %v704
        %v749 = vpop.f32.mrf.mxu0
        %v750 = vadd.f32 0.0, %v749
        %v751 = vpop.f32.mrf.mxu0
        %v752 = vpop.f32.mrf.mxu0
        %v753 = vadd.f32 0.0, %v752
        %v754 = vpop.f32.mrf.mxu0
        %755 = vmatprep.mubr.bf16.mxu0 0
        %756 = vmatmul.mubr.bf16.gmra.mxu0 %v707
        %v757 = vpop.f32.mrf.mxu0
        %v758 = vadd.f32 0.0, %v757
        %v759 = vpop.f32.mrf.mxu0
        %v760 = vpop.f32.mrf.mxu0
        %v761 = vadd.f32 0.0, %v760
        %v762 = vpop.f32.mrf.mxu0
        %763 = vmatprep.mubr.bf16.mxu0 0
        %764 = vmatmul.mubr.bf16.gmra.mxu0 %v710
        %v765 = vpop.f32.mrf.mxu0
        %v766 = vadd.f32 0.0, %v765
        %v767 = vpop.f32.mrf.mxu0
        %v768 = vpop.f32.mrf.mxu0
        %v769 = vadd.f32 0.0, %v768
        %v770 = vpop.f32.mrf.mxu0
        %771 = vmatprep.mubr.bf16.mxu0 0
        %772 = vmatmul.mubr.bf16.gmra.mxu0 %v713
        %v773 = vpop.f32.mrf.mxu0
        %v774 = vadd.f32 0.0, %v773
        %v775 = vpop.f32.mrf.mxu0
        %v776 = vpop.f32.mrf.mxu0
        %v777 = vadd.f32 0.0, %v776
        %v778 = vpop.f32.mrf.mxu0
        %779 = vdwg.mxu0
        %v796 = vunpack.c.l.b16 %v654
        %v797 = vunpack.c.l.b16 %v655
        %v798 = vunpack.c.l.b16 %v656
        %v799 = vunpack.c.l.b16 %v657
        %v800 = vunpack.c.l.b16 %v658
        %v801 = vunpack.c.l.b16 %v659
        %v802 = vunpack.c.l.b16 %v660
        %v803 = vunpack.c.l.b16 %v661
        %v804 = vunpack.c.l.b16 %v662
        %v805 = vunpack.c.l.b16 %v663
        %v806 = vunpack.c.l.b16 %v664
        %v807 = vunpack.c.l.b16 %v665
        %v808 = vunpack.c.l.b16 %v666
        %v809 = vunpack.c.l.b16 %v667
        %v810 = vunpack.c.l.b16 %v668
        %v811 = vunpack.c.l.b16 %v669
        %v812 = vpack.c.b16 %v797, %v796
        %v813 = vpack.c.b16 %v799, %v798
        %v814 = vpack.c.b16 %v801, %v800
        %v815 = vpack.c.b16 %v803, %v802
        %v816 = vpack.c.b16 %v805, %v804
        %v817 = vpack.c.b16 %v807, %v806
        %v818 = vpack.c.b16 %v809, %v808
        %v819 = vpack.c.b16 %v811, %v810
        %828 = vmatprep.subr.bf16.mxu0 0
        %829 = vmatpush1.bf16.msra.mxu0 %v819
        %830 = vmatprep.subr.bf16.mxu0 0
        %831 = vmatpush1.bf16.msra.mxu0 %v818
        %832 = vmatprep.subr.bf16.mxu0 0
        %833 = vmatpush1.bf16.msra.mxu0 %v817
        %834 = vmatprep.subr.bf16.mxu0 0
        %835 = vmatpush1.bf16.msra.mxu0 %v816
        %836 = vmatprep.subr.bf16.mxu0 0
        %837 = vmatpush1.bf16.msra.mxu0 %v815
        %838 = vmatprep.subr.bf16.mxu0 0
        %839 = vmatpush1.bf16.msra.mxu0 %v814
        %840 = vmatprep.subr.bf16.mxu0 0
        %841 = vmatpush1.bf16.msra.mxu0 %v813
        %842 = vmatprep.subr.bf16.mxu0 0
        %843 = vmatpush1.bf16.msra.mxu0 %v812
        %844 = vmatprep.subr.bf16.mxu0 0
        %845 = vmatpush2.bf16.msra.mxu0 0
        %846 = vmatprep.subr.bf16.mxu0 0
        %847 = vmatpush2.bf16.msra.mxu0 0
        %848 = vmatprep.subr.bf16.mxu0 0
        %849 = vmatpush2.bf16.msra.mxu0 0
        %850 = vmatprep.subr.bf16.mxu0 0
        %851 = vmatpush2.bf16.msra.mxu0 0
        %852 = vmatprep.subr.bf16.mxu0 0
        %853 = vmatpush2.bf16.msra.mxu0 0
        %854 = vmatprep.subr.bf16.mxu0 0
        %855 = vmatpush2.bf16.msra.mxu0 0
        %856 = vmatprep.subr.bf16.mxu0 0
        %857 = vmatpush2.bf16.msra.mxu0 0
        %858 = vmatprep.subr.bf16.mxu0 0
        %859 = vmatpush2.bf16.msra.mxu0 0
        %860 = vmatprep.mubr.bf16.mxu0 0
        %861 = vmatmul.mubr.bf16.gmra.mxu0 %v502
        %v862 = vpop.f32.mrf.mxu0
        %v863 = vadd.f32 %v750, %v862
        %v864 = vpop.f32.mrf.mxu0
        %v865 = vpop.f32.mrf.mxu0
        %v866 = vadd.f32 %v753, %v865
        %v867 = vpop.f32.mrf.mxu0
        %868 = vmatprep.mubr.bf16.mxu0 0
        %869 = vmatmul.mubr.bf16.gmra.mxu0 %v503
        %v870 = vpop.f32.mrf.mxu0
        %v871 = vadd.f32 %v758, %v870
        %v872 = vpop.f32.mrf.mxu0
        %v873 = vpop.f32.mrf.mxu0
        %v874 = vadd.f32 %v761, %v873
        %v875 = vpop.f32.mrf.mxu0
        %876 = vmatprep.mubr.bf16.mxu0 0
        %877 = vmatmul.mubr.bf16.gmra.mxu0 %v504
        %v878 = vpop.f32.mrf.mxu0
        %v879 = vadd.f32 %v766, %v878
        %v880 = vpop.f32.mrf.mxu0
        %v881 = vpop.f32.mrf.mxu0
        %v882 = vadd.f32 %v769, %v881
        %v883 = vpop.f32.mrf.mxu0
        %884 = vmatprep.mubr.bf16.mxu0 0
        %885 = vmatmul.mubr.bf16.gmra.mxu0 %v505
        %v886 = vpop.f32.mrf.mxu0
        %v887 = vadd.f32 %v774, %v886
        %v888 = vpop.f32.mrf.mxu0
        %v889 = vpop.f32.mrf.mxu0
        %v890 = vadd.f32 %v777, %v889
        %v891 = vpop.f32.mrf.mxu0
        %892 = vdwg.mxu0
        %v893 = vld [vmem:[%s7] sm:$0x1]
        %v895 = vlaneseq
        %v896 = vshrl.u32 %v895, 7
        %v897 = vsub.s32 0, %v896
        %v898 = vrot.slane %v893, %v897
        %v900 = vadd.f32 %v863, %v898
        %v901 = vadd.f32 %v866, %v898
        %v902 = vadd.f32 %v871, %v898
        %v903 = vadd.f32 %v874, %v898
        %v904 = vadd.f32 %v879, %v898
        %v905 = vadd.f32 %v882, %v898
        %v906 = vadd.f32 %v887, %v898
        %v907 = vadd.f32 %v890, %v898
        %v908 = vpack.c.bf16 %v901, %v900
        %v909 = vpack.c.bf16 %v903, %v902
        %v910 = vpack.c.bf16 %v905, %v904
        %v911 = vpack.c.bf16 %v907, %v906
        %v912 = vld [vmem:[%s8] sm:$0xf]
        %v913 = vld [vmem:[%s8 + $0x4] sm:$0xf]
        %v914 = vld [vmem:[%s8 + $0x8] sm:$0xf]
        %v915 = vld [vmem:[%s8 + $0xc] sm:$0xf]
        %v916 = vld [vmem:[%s8 + $0x10] sm:$0xf]
        %v917 = vld [vmem:[%s8 + $0x14] sm:$0xf]
        %v918 = vld [vmem:[%s8 + $0x18] sm:$0xf]
        %v919 = vld [vmem:[%s8 + $0x1c] sm:$0xf]
        %v920 = vld [vmem:[%s9] sm:$0x1]
        %v922 = vlaneseq
        %v923 = vshrl.u32 %v922, 7
        %v924 = vsub.s32 0, %v923
        %v925 = vrot.slane %v920, %v924
        %v935 = vunpack.c.l.b16 %v912
        %v936 = vunpack.c.l.b16 %v913
        %v937 = vunpack.c.l.b16 %v914
        %v938 = vunpack.c.l.b16 %v915
        %v939 = vunpack.c.l.b16 %v916
        %v940 = vunpack.c.l.b16 %v917
        %v941 = vunpack.c.l.b16 %v918
        %v942 = vunpack.c.l.b16 %v919
        %v943 = vpack.c.b16 %v936, %v935
        %v944 = vpack.c.b16 %v938, %v937
        %v945 = vpack.c.b16 %v940, %v939
        %v946 = vpack.c.b16 %v942, %v941
        %v952 = vsel %vm702, %v908, 0
        %v955 = vsel %vm702, %v909, 0
        %v958 = vsel %vm702, %v910, 0
        %v961 = vsel %vm702, %v911, 0
        %963 = vmatprep.subr.bf16.mxu0 0
        %964 = vmatpush1.bf16.msra.mxu0 0
        %965 = vmatprep.subr.bf16.mxu0 0
        %966 = vmatpush1.bf16.msra.mxu0 0
        %967 = vmatprep.subr.bf16.mxu0 0
        %968 = vmatpush1.bf16.msra.mxu0 0
        %969 = vmatprep.subr.bf16.mxu0 0
        %970 = vmatpush1.bf16.msra.mxu0 0
        %971 = vmatprep.subr.bf16.mxu0 0
        %972 = vmatpush1.bf16.msra.mxu0 %v946
        %973 = vmatprep.subr.bf16.mxu0 0
        %974 = vmatpush1.bf16.msra.mxu0 %v945
        %975 = vmatprep.subr.bf16.mxu0 0
        %976 = vmatpush1.bf16.msra.mxu0 %v944
        %977 = vmatprep.subr.bf16.mxu0 0
        %978 = vmatpush1.bf16.msra.mxu0 %v943
        %979 = vmatprep.subr.bf16.mxu0 0
        %980 = vmatpush2.bf16.msra.mxu0 0
        %981 = vmatprep.subr.bf16.mxu0 0
        %982 = vmatpush2.bf16.msra.mxu0 0
        %983 = vmatprep.subr.bf16.mxu0 0
        %984 = vmatpush2.bf16.msra.mxu0 0
        %985 = vmatprep.subr.bf16.mxu0 0
        %986 = vmatpush2.bf16.msra.mxu0 0
        %987 = vmatprep.subr.bf16.mxu0 0
        %988 = vmatpush2.bf16.msra.mxu0 0
        %989 = vmatprep.subr.bf16.mxu0 0
        %990 = vmatpush2.bf16.msra.mxu0 0
        %991 = vmatprep.subr.bf16.mxu0 0
        %992 = vmatpush2.bf16.msra.mxu0 0
        %993 = vmatprep.subr.bf16.mxu0 0
        %994 = vmatpush2.bf16.msra.mxu0 0
        %995 = vmatprep.mubr.bf16.mxu0 0
        %996 = vmatmul.mubr.bf16.gmra.mxu0 %v952
        %v997 = vpop.f32.mrf.mxu0
        %v998 = vadd.f32 %v925, %v997
        %v999 = vpop.f32.mrf.mxu0
        %v1000 = vpop.f32.mrf.mxu0
        %v1001 = vadd.f32 %v925, %v1000
        %v1002 = vpop.f32.mrf.mxu0
        %1003 = vmatprep.mubr.bf16.mxu0 0
        %1004 = vmatmul.mubr.bf16.gmra.mxu0 %v955
        %v1005 = vpop.f32.mrf.mxu0
        %v1006 = vadd.f32 %v925, %v1005
        %v1007 = vpop.f32.mrf.mxu0
        %v1008 = vpop.f32.mrf.mxu0
        %v1009 = vadd.f32 %v925, %v1008
        %v1010 = vpop.f32.mrf.mxu0
        %1011 = vmatprep.mubr.bf16.mxu0 0
        %1012 = vmatmul.mubr.bf16.gmra.mxu0 %v958
        %v1013 = vpop.f32.mrf.mxu0
        %v1014 = vadd.f32 %v925, %v1013
        %v1015 = vpop.f32.mrf.mxu0
        %v1016 = vpop.f32.mrf.mxu0
        %v1017 = vadd.f32 %v925, %v1016
        %v1018 = vpop.f32.mrf.mxu0
        %1019 = vmatprep.mubr.bf16.mxu0 0
        %1020 = vmatmul.mubr.bf16.gmra.mxu0 %v961
        %v1021 = vpop.f32.mrf.mxu0
        %v1022 = vadd.f32 %v925, %v1021
        %v1023 = vpop.f32.mrf.mxu0
        %v1024 = vpop.f32.mrf.mxu0
        %v1025 = vadd.f32 %v925, %v1024
        %v1026 = vpop.f32.mrf.mxu0
        %1027 = vdwg.mxu0
        %v1028 = vmax.f32 %v998, 0.0
        %v1029 = vmax.f32 %v1001, 0.0
        %v1030 = vmax.f32 %v1006, 0.0
        %v1031 = vmax.f32 %v1009, 0.0
        %v1032 = vmax.f32 %v1014, 0.0
        %v1033 = vmax.f32 %v1017, 0.0
        %v1034 = vmax.f32 %v1022, 0.0
        %v1035 = vmax.f32 %v1025, 0.0
        %v1036 = vpack.c.bf16 %v1029, %v1028
        %v1037 = vpack.c.bf16 %v1031, %v1030
        %v1038 = vpack.c.bf16 %v1033, %v1032
        %v1039 = vpack.c.bf16 %v1035, %v1034
        %v1040 = vld [vmem:[%s10] sm:$0xf]
        %v1041 = vld [vmem:[%s10 + $0x4] sm:$0xf]
        %v1042 = vld [vmem:[%s10 + $0x8] sm:$0xf]
        %v1043 = vld [vmem:[%s10 + $0xc] sm:$0xf]
        %v1044 = vld [vmem:[%s10 + $0x10] sm:$0xf]
        %v1045 = vld [vmem:[%s10 + $0x14] sm:$0xf]
        %v1046 = vld [vmem:[%s10 + $0x18] sm:$0xf]
        %v1047 = vld [vmem:[%s10 + $0x1c] sm:$0xf]
        %v1048 = vld [vmem:[%s10 + $0x20] sm:$0xf]
        %v1049 = vld [vmem:[%s10 + $0x24] sm:$0xf]
        %v1050 = vld [vmem:[%s10 + $0x28] sm:$0xf]
        %v1051 = vld [vmem:[%s10 + $0x2c] sm:$0xf]
        %v1052 = vld [vmem:[%s10 + $0x30] sm:$0xf]
        %v1053 = vld [vmem:[%s10 + $0x34] sm:$0xf]
        %v1054 = vld [vmem:[%s10 + $0x38] sm:$0xf]
        %v1055 = vld [vmem:[%s10 + $0x3c] sm:$0xf]
        %v1056 = vld [vmem:[%s11] sm:$0x1]
        %v1058 = vlaneseq
        %v1059 = vshrl.u32 %v1058, 7
        %v1060 = vsub.s32 0, %v1059
        %v1061 = vrot.slane %v1056, %v1060
        %v1079 = vunpack.c.l.b16 %v1040
        %v1080 = vunpack.c.l.b16 %v1041
        %v1081 = vunpack.c.l.b16 %v1042
        %v1082 = vunpack.c.l.b16 %v1043
        %v1083 = vunpack.c.l.b16 %v1044
        %v1084 = vunpack.c.l.b16 %v1045
        %v1085 = vunpack.c.l.b16 %v1046
        %v1086 = vunpack.c.l.b16 %v1047
        %v1087 = vunpack.c.l.b16 %v1048
        %v1088 = vunpack.c.l.b16 %v1049
        %v1089 = vunpack.c.l.b16 %v1050
        %v1090 = vunpack.c.l.b16 %v1051
        %v1091 = vunpack.c.l.b16 %v1052
        %v1092 = vunpack.c.l.b16 %v1053
        %v1093 = vunpack.c.l.b16 %v1054
        %v1094 = vunpack.c.l.b16 %v1055
        %v1095 = vpack.c.b16 %v1080, %v1079
        %v1096 = vpack.c.b16 %v1082, %v1081
        %v1097 = vpack.c.b16 %v1084, %v1083
        %v1098 = vpack.c.b16 %v1086, %v1085
        %v1099 = vpack.c.b16 %v1088, %v1087
        %v1100 = vpack.c.b16 %v1090, %v1089
        %v1101 = vpack.c.b16 %v1092, %v1091
        %v1102 = vpack.c.b16 %v1094, %v1093
        %1111 = vmatprep.subr.bf16.mxu0 0
        %1112 = vmatpush1.bf16.msra.mxu0 %v1102
        %1113 = vmatprep.subr.bf16.mxu0 0
        %1114 = vmatpush1.bf16.msra.mxu0 %v1101
        %1115 = vmatprep.subr.bf16.mxu0 0
        %1116 = vmatpush1.bf16.msra.mxu0 %v1100
        %1117 = vmatprep.subr.bf16.mxu0 0
        %1118 = vmatpush1.bf16.msra.mxu0 %v1099
        %1119 = vmatprep.subr.bf16.mxu0 0
        %1120 = vmatpush1.bf16.msra.mxu0 %v1098
        %1121 = vmatprep.subr.bf16.mxu0 0
        %1122 = vmatpush1.bf16.msra.mxu0 %v1097
        %1123 = vmatprep.subr.bf16.mxu0 0
        %1124 = vmatpush1.bf16.msra.mxu0 %v1096
        %1125 = vmatprep.subr.bf16.mxu0 0
        %1126 = vmatpush1.bf16.msra.mxu0 %v1095
        %1127 = vmatprep.subr.bf16.mxu0 0
        %1128 = vmatpush2.bf16.msra.mxu0 0
        %1129 = vmatprep.subr.bf16.mxu0 0
        %1130 = vmatpush2.bf16.msra.mxu0 0
        %1131 = vmatprep.subr.bf16.mxu0 0
        %1132 = vmatpush2.bf16.msra.mxu0 0
        %1133 = vmatprep.subr.bf16.mxu0 0
        %1134 = vmatpush2.bf16.msra.mxu0 0
        %1135 = vmatprep.subr.bf16.mxu0 0
        %1136 = vmatpush2.bf16.msra.mxu0 0
        %1137 = vmatprep.subr.bf16.mxu0 0
        %1138 = vmatpush2.bf16.msra.mxu0 0
        %1139 = vmatprep.subr.bf16.mxu0 0
        %1140 = vmatpush2.bf16.msra.mxu0 0
        %1141 = vmatprep.subr.bf16.mxu0 0
        %1142 = vmatpush2.bf16.msra.mxu0 0
        %1143 = vmatprep.mubr.bf16.mxu0 0
        %1144 = vmatmul.mubr.bf16.gmra.mxu0 %v1036
        %v1145 = vpop.f32.mrf.mxu0
        %v1146 = vadd.f32 %v1061, %v1145
        %v1147 = vpop.f32.mrf.mxu0
        %v1148 = vpop.f32.mrf.mxu0
        %v1149 = vadd.f32 %v1061, %v1148
        %v1150 = vpop.f32.mrf.mxu0
        %1151 = vmatprep.mubr.bf16.mxu0 0
        %1152 = vmatmul.mubr.bf16.gmra.mxu0 %v1037
        %v1153 = vpop.f32.mrf.mxu0
        %v1154 = vadd.f32 %v1061, %v1153
        %v1155 = vpop.f32.mrf.mxu0
        %v1156 = vpop.f32.mrf.mxu0
        %v1157 = vadd.f32 %v1061, %v1156
        %v1158 = vpop.f32.mrf.mxu0
        %1159 = vmatprep.mubr.bf16.mxu0 0
        %1160 = vmatmul.mubr.bf16.gmra.mxu0 %v1038
        %v1161 = vpop.f32.mrf.mxu0
        %v1162 = vadd.f32 %v1061, %v1161
        %v1163 = vpop.f32.mrf.mxu0
        %v1164 = vpop.f32.mrf.mxu0
        %v1165 = vadd.f32 %v1061, %v1164
        %v1166 = vpop.f32.mrf.mxu0
        %1167 = vmatprep.mubr.bf16.mxu0 0
        %1168 = vmatmul.mubr.bf16.gmra.mxu0 %v1039
        %v1169 = vpop.f32.mrf.mxu0
        %v1170 = vadd.f32 %v1061, %v1169
        %v1171 = vpop.f32.mrf.mxu0
        %v1172 = vpop.f32.mrf.mxu0
        %v1173 = vadd.f32 %v1061, %v1172
        %v1174 = vpop.f32.mrf.mxu0
        %1175 = vdwg.mxu0
        %v1176 = vld [vmem:[%s491] sm:$0x1]
        %v1178 = vlaneseq
        %v1179 = vshrl.u32 %v1178, 7
        %v1180 = vsub.s32 0, %v1179
        %v1181 = vrot.slane %v1176, %v1180
        %v1183 = vadd.f32 %v1146, %v1181
        %v1184 = vadd.f32 %v1149, %v1181
        %v1185 = vadd.f32 %v1154, %v1181
        %v1186 = vadd.f32 %v1157, %v1181
        %v1187 = vadd.f32 %v1162, %v1181
        %v1188 = vadd.f32 %v1165, %v1181
        %v1189 = vadd.f32 %v1170, %v1181
        %v1190 = vadd.f32 %v1173, %v1181
        %v1191 = vsub.f32 0.0, %v1183
        %v1192 = vsub.f32 0.0, %v1184
        %v1193 = vsub.f32 0.0, %v1185
        %v1194 = vsub.f32 0.0, %v1186
        %v1195 = vsub.f32 0.0, %v1187
        %v1196 = vsub.f32 0.0, %v1188
        %v1197 = vsub.f32 0.0, %v1189
        %v1198 = vsub.f32 0.0, %v1190
        %v1199 = vmul.f32 %v1191, 1.442695
        %v1200 = vpow.pop %v1199
        %v1201 = vmul.f32 %v1192, 1.442695
        %v1202 = vpow.pop %v1201
        %v1203 = vmul.f32 %v1193, 1.442695
        %v1204 = vpow.pop %v1203
        %v1205 = vmul.f32 %v1194, 1.442695
        %v1206 = vpow.pop %v1205
        %v1207 = vmul.f32 %v1195, 1.442695
        %v1208 = vpow.pop %v1207
        %v1209 = vmul.f32 %v1196, 1.442695
        %v1210 = vpow.pop %v1209
        %v1211 = vmul.f32 %v1197, 1.442695
        %v1212 = vpow.pop %v1211
        %v1213 = vmul.f32 %v1198, 1.442695
        %v1214 = vpow.pop %v1213
        %v1215 = vadd.f32 %v1200, 1.0
        %v1216 = vadd.f32 %v1202, 1.0
        %v1217 = vadd.f32 %v1204, 1.0
        %v1218 = vadd.f32 %v1206, 1.0
        %v1219 = vadd.f32 %v1208, 1.0
        %v1220 = vadd.f32 %v1210, 1.0
        %v1221 = vadd.f32 %v1212, 1.0
        %v1222 = vadd.f32 %v1214, 1.0
        %v1223 = vrcp.pop %v1215
        %v1224 = vrcp.pop %v1216
        %v1225 = vrcp.pop %v1217
        %v1226 = vrcp.pop %v1218
        %v1227 = vrcp.pop %v1219
        %v1228 = vrcp.pop %v1220
        %v1229 = vrcp.pop %v1221
        %v1230 = vrcp.pop %v1222
        %v1231 = vsub.f32 %v624, %v506
        %v1232 = vsub.f32 %v627, %v507
        %v1233 = vsub.f32 %v632, %v508
        %v1234 = vsub.f32 %v635, %v509
        %v1235 = vsub.f32 %v640, %v510
        %v1236 = vsub.f32 %v643, %v511
        %v1237 = vsub.f32 %v648, %v512
        %v1238 = vsub.f32 %v651, %v513
        %v1239 = vmul.f32 %v1223, %v1231
        %v1240 = vmul.f32 %v1224, %v1232
        %v1241 = vmul.f32 %v1225, %v1233
        %v1242 = vmul.f32 %v1226, %v1234
        %v1243 = vmul.f32 %v1227, %v1235
        %v1244 = vmul.f32 %v1228, %v1236
        %v1245 = vmul.f32 %v1229, %v1237
        %v1246 = vmul.f32 %v1230, %v1238
        %v1247 = vadd.f32 %v506, %v1239
        %v1248 = vadd.f32 %v507, %v1240
        %v1249 = vadd.f32 %v508, %v1241
        %v1250 = vadd.f32 %v509, %v1242
        %v1251 = vadd.f32 %v510, %v1243
        %v1252 = vadd.f32 %v511, %v1244
        %v1253 = vadd.f32 %v512, %v1245
        %v1254 = vadd.f32 %v513, %v1246
        %v1255 = vmul.f32 %v1247, 2.0
        %v1256 = vmul.f32 %v1248, 2.0
        %v1257 = vmul.f32 %v1249, 2.0
        %v1258 = vmul.f32 %v1250, 2.0
        %v1259 = vmul.f32 %v1251, 2.0
        %v1260 = vmul.f32 %v1252, 2.0
        %v1261 = vmul.f32 %v1253, 2.0
        %v1262 = vmul.f32 %v1254, 2.0
        %1263 = vst.msk [vmem:[%s468] sm:$0xff] %vm702, %v1255
        %1264 = vst.msk [vmem:[%s468 + $0x8] sm:$0xff] %vm702, %v1256
        %1265 = vst.msk [vmem:[%s468 + $0x10] sm:$0xff] %vm702, %v1257
        %1266 = vst.msk [vmem:[%s468 + $0x18] sm:$0xff] %vm702, %v1258
        %1267 = vst.msk [vmem:[%s468 + $0x20] sm:$0xff] %vm702, %v1259
        %1268 = vst.msk [vmem:[%s468 + $0x28] sm:$0xff] %vm702, %v1260
        %1269 = vst.msk [vmem:[%s468 + $0x30] sm:$0xff] %vm702, %v1261
        %1270 = vst.msk [vmem:[%s468 + $0x38] sm:$0xff] %vm702, %v1262
        %s1271 = sand.u32 %s319, 1
        %s1272 = scalar_lea.sflag [#allocation3], %s1271
        %s1273 = sand.u32 %s319, 1
        %s1274 = smul.addr %s1273, 64
        %s1275 = scalar_lea.vmem [#allocation2], %s1274
        // Predicated region
        $region69: #{avff_attention_nlc.1} parent=67 // pred_check
          %p1276 = pneg %p329
        $region70: #{avff_attention_nlc.1} parent=67 // pred_check_branch
          %1278 = sbr.rel (%p1276) target = $region72
        $region71: #{avff_attention_nlc.1} parent=67 // pred_region
          %s1279 = smul.u32 8, %s31
          %s1281 = ssub.s32 1024, 1024
          %1282 = vsyncadd %s1272, %s1281
          %s1283 = smul.addr %s30, 8
          %s1284 = sadd.s32 %s1279, %s1283
          %s1285 = smul.addr %s1284, 128
          %s1286 = scalar_lea.hbm %s12, %s1285
          %s1287 = sshll.u32 %s1275, 4
          %s1288 = int_to_ptr.vmem [resolvable:$true] %s1287
          %1293 = dma.vmem_to_hbm [thread:$0]  %s1288, 1024, %s1286, %s1272, 128, 128, 8
        $region72: #{avff_attention_nlc.1} parent=67 // pred_fallthru
          _
      $region68: #{avff_attention_nlc.1} parent=5 // pred_fallthru
        _
      %p1294 = scmp.le.s32.totalorder 2, %s21
      // Predicated region
      $region73: #{avff_attention_nlc.1} parent=5 // pred_check
        %p1295 = pneg %p1294
      $region74: #{avff_attention_nlc.1} parent=5 // pred_check_branch
        %1297 = sbr.rel (%p1295) target = $region76
      $region75: #{avff_attention_nlc.1} parent=5 // pred_region
        %s1298 = ssub.s32 %s21, 2
        // Predicated region
        $region77: #{avff_attention_nlc.1} parent=75 // pred_check
          %p1299 = pneg %p335
        $region78: #{avff_attention_nlc.1} parent=75 // pred_check_branch
          %1301 = sbr.rel (%p1299) target = $region80
        $region79: #{avff_attention_nlc.1} parent=75 // pred_region
          %s1302 = sand.u32 %s320, 1
          %s1303 = scalar_lea.sflag [#allocation3], %s1302
          %s1304 = sand.u32 %s320, 1
          %s1305 = smul.addr %s1304, 64
          %s1306 = scalar_lea.vmem [#allocation2], %s1305
          %1307 = dma.done %s1303, 1024
        $region80: #{avff_attention_nlc.1} parent=75 // pred_fallthru
          _
      $region76: #{avff_attention_nlc.1} parent=5 // pred_fallthru
        _
    $region6: #{avff_attention_nlc.1} parent=1 // loop_footer
      %s25 = sadd.s32 1, %s21
    $region7: #{avff_attention_nlc.1} parent=1 // loop_footer_branch
      %20 = sbr.rel target = $region3
    $region8: #{avff_attention_nlc.1} parent=1 // loop_exit
      _
    %1308 = vsyncpa [#allocation3], 1
    %s1309 = scalar_lea.sflag [#allocation3], 1
    %1310 = vsyncpa %s1309, 1

</llo_original>
